<compile_context>
chip_gen: v6e
topology: v6e:2x2x1
jax: 0.10.0
libtpu: 0.0.40
codegen_flags: <defaults>
</compile_context>

<pallas_src>
import jax
import jax.numpy as jnp
from jax import lax
from jax.experimental import pallas as pl
from jax.experimental.pallas import tpu as pltpu


def conve_kernel(x_ref,      # (TB, HWp)   stacked s/r embedding image (padded)
                 oemb_ref,   # (TB, Dp)    object embedding (padded)
                 cwb_ref,    # (HWp, Fp)   dense conv weight (Toeplitz form)
                 cb_ref,     # (1, Fp)     conv bias per (pos, channel)
                 lw_ref,     # (Fp, Dp)    BN2-folded Linear weight
                 lb_ref,     # (1, Dp)     BN2-folded Linear bias
                 s1_ref,     # (1, Dp)     folded BatchNorm1d scale
                 t1_ref,     # (1, Dp)     folded BatchNorm1d shift
                 out_ref):   # (TB, 128)   score broadcast across lanes
    # Conv2d (valid, 1 input channel) as a single MXU matmul + bias + ReLU.
    a = jnp.dot(x_ref[...], cwb_ref[...], preferred_element_type=jnp.float32)
    a = jnp.maximum(a + cb_ref[...], 0.0)

    # BatchNorm2d (eval) already folded into lw/lb.  Linear + ReLU.
    hid = jnp.dot(a, lw_ref[...], preferred_element_type=jnp.float32)
    hid = jnp.maximum(hid + lb_ref[...], 0.0)

    # BatchNorm1d (eval), folded to a per-feature scale/shift.
    hid = hid * s1_ref[...] + t1_ref[...]

    # score = sum(hid * embed_o) per example; broadcast to a lane-dense tile.
    score = jnp.sum(hid * oemb_ref[...], axis=-1, keepdims=True)   # (TB, 1)
    out_ref[...] = jnp.broadcast_to(score, out_ref.shape)


def _round_up(n, m):
    return ((n + m - 1) // m) * m


def conve_forward(s_idx, r_idx, o_idx, params, *, emb_w, kernel_size=3,
                  block_b=128):
    D = params["embed_e"].shape[1]
    emb_h = D // emb_w
    B = s_idx.shape[0]
    C = params["conv_w"].shape[0]
    KH = KW = kernel_size
    H, W = 2 * emb_w, emb_h
    H2, W2 = H - KH + 1, W - KW + 1
    F = H2 * W2 * C
    eps = 1e-5

    # Lane-dense padded sizes.
    HWp = _round_up(H * W, 128)
    Fp = _round_up(F, 128)
    Dp = _round_up(D, 128)
    TB = max(8, min(block_b, _round_up(B, 8)))
    Bp = _round_up(B, TB)

    # ---- glue: embedding lookups + image build (pure data movement) -------
    embed_s = jnp.take(params["embed_e"], s_idx, axis=0)      # (B, D)
    embed_o = jnp.take(params["embed_e"], o_idx, axis=0)      # (B, D)
    embed_r = jnp.take(params["embed_r"], r_idx, axis=0)      # (B, D)
    img = jnp.concatenate(
        [embed_s.reshape(B, emb_w, emb_h), embed_r.reshape(B, emb_w, emb_h)],
        axis=1)                                               # (B, H, W)
    x2d = jnp.pad(img.reshape(B, H * W), ((0, Bp - B), (0, HWp - H * W)))
    oemb = jnp.pad(embed_o, ((0, Bp - B), (0, Dp - D)))

    # ---- glue: conv kernel -> dense (H*W, F) matrix (conv of the identity
    # basis), so the in-kernel conv is one matmul.  Columns ordered (pos, c).
    eye = jnp.eye(H * W, dtype=jnp.float32).reshape(H * W, 1, H, W)
    resp = lax.conv_general_dilated(
        eye, params["conv_w"], (1, 1), "VALID",
        dimension_numbers=("NCHW", "OIHW", "NCHW"))           # (HW, C, H2, W2)
    cw_big = resp.transpose(0, 2, 3, 1).reshape(H * W, F)
    cw_big = jnp.pad(cw_big, ((0, HWp - H * W), (0, Fp - F)))
    cb_big = jnp.tile(params["conv_b"][None, :], (H2 * W2, 1)).reshape(1, F)
    cb_big = jnp.pad(cb_big, ((0, 0), (0, Fp - F)))

    # ---- glue: fold BatchNorm2d (eval) into the Linear layer ---------------
    s2 = params["bn2_gamma"] / jnp.sqrt(params["bn2_var"] + eps)   # (C,)
    t2 = params["bn2_beta"] - params["bn2_mean"] * s2              # (C,)
    # torch Linear weight: (D, F_torch) with F_torch ordered (c, h2, w2).
    lw_pcd = (params["lin_w"].reshape(D, C, H2, W2)
              .transpose(2, 3, 1, 0).reshape(H2 * W2, C, D))       # (P, C, D)
    lb_fold = params["lin_b"] + jnp.einsum("pcd,c->d", lw_pcd, t2)
    lw_fold = (lw_pcd * s2[None, :, None]).reshape(F, D)
    lw_fold = jnp.pad(lw_fold, ((0, Fp - F), (0, Dp - D)))
    lb_fold = jnp.pad(lb_fold, (0, Dp - D)).reshape(1, Dp)

    # ---- glue: fold BatchNorm1d (eval) into scale/shift rows ---------------
    s1 = params["bn1_gamma"] / jnp.sqrt(params["bn1_var"] + eps)
    t1 = params["bn1_beta"] - params["bn1_mean"] * s1
    s1p = jnp.pad(s1, (0, Dp - D)).reshape(1, Dp)
    t1p = jnp.pad(t1, (0, Dp - D)).reshape(1, Dp)

    grid = (Bp // TB,)

    def batch_spec(cols):
        return pl.BlockSpec((TB, cols), lambda i: (i, 0))

    def const_spec(shape):
        # Grid-invariant weight tile: constant block index -> fetched once.
        return pl.BlockSpec(tuple(shape), lambda i, nd=len(shape): (0,) * nd)

    flops = 2 * Bp * HWp * Fp + 2 * Bp * Fp * Dp + 6 * Bp * Dp
    bytes_accessed = 4 * (Bp * HWp + Bp * Dp + HWp * Fp + Fp * Dp
                          + 4 * Fp + 4 * Dp + Bp * 128)

    out = pl.pallas_call(
        conve_kernel,
        out_shape=jax.ShapeDtypeStruct((Bp, 128), jnp.float32),
        grid_spec=pltpu.PrefetchScalarGridSpec(
            num_scalar_prefetch=0,
            grid=grid,
            in_specs=[batch_spec(HWp),            # x
                      batch_spec(Dp),             # embed_o
                      const_spec((HWp, Fp)),      # dense conv weight
                      const_spec((1, Fp)),        # conv bias row
                      const_spec((Fp, Dp)),       # folded linear weight
                      const_spec((1, Dp)),        # folded linear bias
                      const_spec((1, Dp)),        # bn1 scale
                      const_spec((1, Dp))],       # bn1 shift
            out_specs=pl.BlockSpec((TB, 128), lambda i: (i, 0)),
        ),
        compiler_params=pltpu.CompilerParams(
            dimension_semantics=("parallel",),
            vmem_limit_bytes=32 * 1024 * 1024),
        cost_estimate=pl.CostEstimate(
            flops=flops, transcendentals=0, bytes_accessed=bytes_accessed),
    )(x2d, oemb, cw_big, cb_big, lw_fold, lb_fold, s1p, t1p)
    return out[:B, 0]


def conve_reference(s_idx, r_idx, o_idx, params, *, emb_w, kernel_size=3):
    """Pure-JAX reference matching the PyTorch forward (eval mode)."""
    D = params["embed_e"].shape[1]
    emb_h = D // emb_w
    B = s_idx.shape[0]
    eps = 1e-5
    embed_s = params["embed_e"][s_idx]
    embed_o = params["embed_e"][o_idx]
    embed_r = params["embed_r"][r_idx]
    conv_in = jnp.concatenate(
        [embed_s.reshape(B, emb_w, emb_h), embed_r.reshape(B, emb_w, emb_h)],
        axis=1)[:, None, :, :]                                # NCHW
    conv = lax.conv_general_dilated(
        conv_in, params["conv_w"], window_strides=(1, 1), padding="VALID",
        dimension_numbers=("NCHW", "OIHW", "NCHW"))
    conv = conv + params["conv_b"][None, :, None, None]
    conv = jnp.maximum(conv, 0.0)
    conv = (conv - params["bn2_mean"][None, :, None, None]) / jnp.sqrt(
        params["bn2_var"][None, :, None, None] + eps)
    conv = (conv * params["bn2_gamma"][None, :, None, None]
            + params["bn2_beta"][None, :, None, None])
    flat = conv.reshape(B, -1)
    hid = flat @ params["lin_w"].T + params["lin_b"]
    hid = jnp.maximum(hid, 0.0)
    hid = (hid - params["bn1_mean"]) / jnp.sqrt(params["bn1_var"] + eps)
    hid = hid * params["bn1_gamma"] + params["bn1_beta"]
    return jnp.sum(hid * embed_o, axis=-1)


def init_params(key, num_e, num_r, hidden_dim, emb_w, conv_channels, ksz):
    emb_h = hidden_dim // emb_w
    H2 = 2 * emb_w - ksz + 1
    W2 = emb_h - ksz + 1
    F = H2 * W2 * conv_channels
    ks = jax.random.split(key, 12)

    def xavier(k, shape):
        return jax.random.normal(k, shape, jnp.float32) * jnp.sqrt(
            2.0 / (shape[0] + shape[1]))

    return dict(
        embed_e=xavier(ks[0], (num_e, hidden_dim)),
        embed_r=xavier(ks[1], (num_r, hidden_dim)),
        conv_w=0.1 * jax.random.normal(ks[2], (conv_channels, 1, ksz, ksz),
                                       jnp.float32),
        conv_b=0.05 * jax.random.normal(ks[3], (conv_channels,), jnp.float32),
        bn2_gamma=1.0 + 0.1 * jax.random.normal(ks[4], (conv_channels,),
                                                jnp.float32),
        bn2_beta=0.1 * jax.random.normal(ks[5], (conv_channels,), jnp.float32),
        bn2_mean=0.05 * jax.random.normal(ks[6], (conv_channels,), jnp.float32),
        bn2_var=1.0 + 0.1 * jax.random.uniform(ks[7], (conv_channels,),
                                               jnp.float32),
        lin_w=jax.random.normal(ks[8], (hidden_dim, F), jnp.float32)
        * jnp.sqrt(1.0 / F),
        lin_b=0.05 * jax.random.normal(ks[9], (hidden_dim,), jnp.float32),
        bn1_gamma=1.0 + 0.1 * jax.random.normal(ks[10], (hidden_dim,),
                                                jnp.float32),
        bn1_beta=0.1 * jax.random.normal(ks[11], (hidden_dim,), jnp.float32),
        bn1_mean=jnp.zeros((hidden_dim,), jnp.float32),
        bn1_var=jnp.ones((hidden_dim,), jnp.float32),
    )


if __name__ == "__main__":
    num_nodes, num_relations = 64, 16
    hidden_dim, emb_w = 32, 4          # -> emb_h = 8, conv input (B, 1, 8, 8)
    conv_channels, kernel_size = 8, 3
    B = 256                            # two batch tiles of 128 -> grid=(2,)

    key = jax.random.PRNGKey(0)
    kp, k_s, k_r, k_o = jax.random.split(key, 4)
    params = init_params(kp, num_nodes, num_relations, hidden_dim, emb_w,
                         conv_channels, kernel_size)
    s = jax.random.randint(k_s, (B,), 0, num_nodes, dtype=jnp.int32)
    r = jax.random.randint(k_r, (B,), 0, num_relations, dtype=jnp.int32)
    o = jax.random.randint(k_o, (B,), 0, num_nodes, dtype=jnp.int32)

    scores = conve_forward(s, r, o, params, emb_w=emb_w,
                           kernel_size=kernel_size)
    scores = jax.block_until_ready(scores)
    ref = conve_reference(s, r, o, params, emb_w=emb_w,
                          kernel_size=kernel_size)

    assert scores.shape == (B,)
    assert jnp.allclose(scores, ref, atol=1e-3, rtol=1e-3), (
        float(jnp.max(jnp.abs(scores - ref))))
    print("KERNEL_OK")
</pallas_src>

<mosaic_0001>
module attributes {stable_mosaic.version = 11 : i64} {
  func.func @conve_kernel(%arg0: i32, %arg1: memref<128x128xf32, #tpu.memory_space<vmem>>, %arg2: memref<128x128xf32, #tpu.memory_space<vmem>>, %arg3: memref<128x384xf32, #tpu.memory_space<vmem>>, %arg4: memref<1x384xf32, #tpu.memory_space<vmem>>, %arg5: memref<384x128xf32, #tpu.memory_space<vmem>>, %arg6: memref<1x128xf32, #tpu.memory_space<vmem>>, %arg7: memref<1x128xf32, #tpu.memory_space<vmem>>, %arg8: memref<1x128xf32, #tpu.memory_space<vmem>>, %arg9: memref<128x128xf32, #tpu.memory_space<vmem>>) attributes {dimension_semantics = [#tpu.dimension_semantics<parallel>], iteration_bounds = array<i64: 2>, scalar_prefetch = 0 : i64, scratch_operands = 0 : i64, tpu.core_type = #tpu.core_type<tc>, window_params = [{transform_indices = @transform_0, window_bounds = array<i64: 128, 128>}, {transform_indices = @transform_1, window_bounds = array<i64: 128, 128>}, {pipeline_mode = #tpu.pipeline_mode<synchronous>, transform_indices = @transform_2, window_bounds = array<i64: 128, 384>}, {pipeline_mode = #tpu.pipeline_mode<synchronous>, transform_indices = @transform_3, window_bounds = array<i64: 1, 384>}, {pipeline_mode = #tpu.pipeline_mode<synchronous>, transform_indices = @transform_4, window_bounds = array<i64: 384, 128>}, {pipeline_mode = #tpu.pipeline_mode<synchronous>, transform_indices = @transform_5, window_bounds = array<i64: 1, 128>}, {pipeline_mode = #tpu.pipeline_mode<synchronous>, transform_indices = @transform_6, window_bounds = array<i64: 1, 128>}, {pipeline_mode = #tpu.pipeline_mode<synchronous>, transform_indices = @transform_7, window_bounds = array<i64: 1, 128>}, {transform_indices = @transform_8, window_bounds = array<i64: 128, 128>}]} {
    %c0 = arith.constant 0 : index
    %c0_0 = arith.constant 0 : index
    %0 = vector.load %arg1[%c0, %c0_0] : memref<128x128xf32, #tpu.memory_space<vmem>>, vector<128x128xf32>
    %c0_1 = arith.constant 0 : index
    %c0_2 = arith.constant 0 : index
    %1 = vector.load %arg3[%c0_1, %c0_2] : memref<128x384xf32, #tpu.memory_space<vmem>>, vector<128x384xf32>
    %cst = arith.constant dense<0.000000e+00> : vector<128x384xf32>
    %2 = tpu.matmul %0, %1, %cst {dimension_numbers = #tpu.dot_dimension_numbers<[1], [0], [0], [1], [0, 0, 1, 1], [], []>} : vector<128x128xf32>, vector<128x384xf32>, vector<128x384xf32> -> vector<128x384xf32>
    %c0_3 = arith.constant 0 : index
    %c0_4 = arith.constant 0 : index
    %3 = vector.load %arg4[%c0_3, %c0_4] : memref<1x384xf32, #tpu.memory_space<vmem>>, vector<1x384xf32>
    %4 = vector.broadcast %3 : vector<1x384xf32> to vector<128x384xf32>
    %5 = arith.addf %2, %4 : vector<128x384xf32>
    %cst_5 = arith.constant 0.000000e+00 : f32
    %6 = vector.broadcast %cst_5 : f32 to vector<128x384xf32>
    %7 = arith.maximumf %5, %6 : vector<128x384xf32>
    %c0_6 = arith.constant 0 : index
    %c0_7 = arith.constant 0 : index
    %8 = vector.load %arg5[%c0_6, %c0_7] : memref<384x128xf32, #tpu.memory_space<vmem>>, vector<384x128xf32>
    %cst_8 = arith.constant dense<0.000000e+00> : vector<128x128xf32>
    %9 = tpu.matmul %7, %8, %cst_8 {dimension_numbers = #tpu.dot_dimension_numbers<[1], [0], [0], [1], [0, 0, 1, 1], [], []>} : vector<128x384xf32>, vector<384x128xf32>, vector<128x128xf32> -> vector<128x128xf32>
    %c0_9 = arith.constant 0 : index
    %c0_10 = arith.constant 0 : index
    %10 = vector.load %arg6[%c0_9, %c0_10] : memref<1x128xf32, #tpu.memory_space<vmem>>, vector<1x128xf32>
    %11 = vector.broadcast %10 : vector<1x128xf32> to vector<128x128xf32>
    %12 = arith.addf %9, %11 : vector<128x128xf32>
    %cst_11 = arith.constant 0.000000e+00 : f32
    %13 = vector.broadcast %cst_11 : f32 to vector<128x128xf32>
    %14 = arith.maximumf %12, %13 : vector<128x128xf32>
    %c0_12 = arith.constant 0 : index
    %c0_13 = arith.constant 0 : index
    %15 = vector.load %arg7[%c0_12, %c0_13] : memref<1x128xf32, #tpu.memory_space<vmem>>, vector<1x128xf32>
    %16 = vector.broadcast %15 : vector<1x128xf32> to vector<128x128xf32>
    %17 = arith.mulf %14, %16 : vector<128x128xf32>
    %c0_14 = arith.constant 0 : index
    %c0_15 = arith.constant 0 : index
    %18 = vector.load %arg8[%c0_14, %c0_15] : memref<1x128xf32, #tpu.memory_space<vmem>>, vector<1x128xf32>
    %19 = vector.broadcast %18 : vector<1x128xf32> to vector<128x128xf32>
    %20 = arith.addf %17, %19 : vector<128x128xf32>
    %c0_16 = arith.constant 0 : index
    %c0_17 = arith.constant 0 : index
    %21 = vector.load %arg2[%c0_16, %c0_17] : memref<128x128xf32, #tpu.memory_space<vmem>>, vector<128x128xf32>
    %22 = arith.mulf %20, %21 : vector<128x128xf32>
    %cst_18 = arith.constant dense<0.000000e+00> : vector<128xf32>
    %23 = vector.multi_reduction <add>, %22, %cst_18 [1] : vector<128x128xf32> to vector<128xf32>
    %24 = vector.shape_cast %23 : vector<128xf32> to vector<128x1xf32>
    %25 = vector.shape_cast %24 : vector<128x1xf32> to vector<128x1xf32>
    %26 = vector.broadcast %25 : vector<128x1xf32> to vector<128x128xf32>
    %c0_19 = arith.constant 0 : index
    %c0_20 = arith.constant 0 : index
    %27 = vector.load %arg9[%c0_19, %c0_20] : memref<128x128xf32, #tpu.memory_space<vmem>>, vector<128x128xf32>
    tpu.vector_store %arg9[%c0_19, %c0_20], %26 {strides = array<i32>} : memref<128x128xf32, #tpu.memory_space<vmem>>, vector<128x128xf32>,
    return
  }
  func.func @transform_0(%arg0: i32) -> (i32, i32) {
    %c0_i32 = arith.constant 0 : i32
    %c0_i32_0 = arith.constant 0 : i32
    return %arg0, %c0_i32 : i32, i32
  }
  func.func @transform_1(%arg0: i32) -> (i32, i32) {
    %c0_i32 = arith.constant 0 : i32
    %c0_i32_0 = arith.constant 0 : i32
    return %arg0, %c0_i32 : i32, i32
  }
  func.func @transform_2(%arg0: i32) -> (i32, i32) {
    %c0_i32 = arith.constant 0 : i32
    %c0_i32_0 = arith.constant 0 : i32
    %c0_i32_1 = arith.constant 0 : i32
    return %c0_i32, %c0_i32_0 : i32, i32
  }
  func.func @transform_3(%arg0: i32) -> (i32, i32) {
    %c0_i32 = arith.constant 0 : i32
    %c0_i32_0 = arith.constant 0 : i32
    %c0_i32_1 = arith.constant 0 : i32
    return %c0_i32, %c0_i32_0 : i32, i32
  }
  func.func @transform_4(%arg0: i32) -> (i32, i32) {
    %c0_i32 = arith.constant 0 : i32
    %c0_i32_0 = arith.constant 0 : i32
    %c0_i32_1 = arith.constant 0 : i32
    return %c0_i32, %c0_i32_0 : i32, i32
  }
  func.func @transform_5(%arg0: i32) -> (i32, i32) {
    %c0_i32 = arith.constant 0 : i32
    %c0_i32_0 = arith.constant 0 : i32
    %c0_i32_1 = arith.constant 0 : i32
    return %c0_i32, %c0_i32_0 : i32, i32
  }
  func.func @transform_6(%arg0: i32) -> (i32, i32) {
    %c0_i32 = arith.constant 0 : i32
    %c0_i32_0 = arith.constant 0 : i32
    %c0_i32_1 = arith.constant 0 : i32
    return %c0_i32, %c0_i32_0 : i32, i32
  }
  func.func @transform_7(%arg0: i32) -> (i32, i32) {
    %c0_i32 = arith.constant 0 : i32
    %c0_i32_0 = arith.constant 0 : i32
    %c0_i32_1 = arith.constant 0 : i32
    return %c0_i32, %c0_i32_0 : i32, i32
  }
  func.func @transform_8(%arg0: i32) -> (i32, i32) {
    %c0_i32 = arith.constant 0 : i32
    %c0_i32_0 = arith.constant 0 : i32
    return %arg0, %c0_i32 : i32, i32
  }
}

</mosaic_0001>

<llo_original>
// kernel: tpu_custom_call.1
$region0: #{tpu_custom_call.1}
  #allocation0 [shape = 'u32[]', space=smem, size = 0x4, offset = 0x4, fixed_abs, tag = 'smem constant byte address 0x4 - core index']
  #allocation1 [shape = 'u32[144,128]{1,0:T(1,128)}', space=vmem, size = 0x12000, scoped, tag = 'internal scratch']
  %s0 = inlined_call_operand.hbm [shape: f32[256,128], index: 0, kind: input, shape index: {}]
  %s1 = inlined_call_operand.hbm [shape: f32[256,128], index: 1, kind: input, shape index: {}]
  %s2 = inlined_call_operand.hbm [shape: f32[128,384], index: 2, kind: input, shape index: {}]
  %s3 = inlined_call_operand.vmem [shape: f32[1,384], index: 3, kind: input, shape index: {}]
  %s4 = inlined_call_operand.hbm [shape: f32[384,128], index: 4, kind: input, shape index: {}]
  %s5 = inlined_call_operand.vmem [shape: f32[1,128], index: 5, kind: input, shape index: {}]
  %s6 = inlined_call_operand.vmem [shape: f32[1,128], index: 6, kind: input, shape index: {}]
  %s7 = inlined_call_operand.vmem [shape: f32[1,128], index: 7, kind: input, shape index: {}]
  %s8 = inlined_call_operand.hbm [shape: f32[256,128], index: 8, kind: output, shape index: {}]
  %s9 = sld [smem:[#allocation0]]
  $region81: #{tpu_custom_call.1} parent=0
    _
  %s11 = ssub.s32 1, %s9
  %s12 = scalar_select 0, %s11, %s9
  $region1: #{tpu_custom_call.1} parent=0
    #allocation2 [shape = 'u8[131072]{0}', space=vmem, size = 0x20000, scoped, tag = 'input window, operand 0']
    #allocation3 [shape = 's32[2]{0}', space=sflag, size = 0x8, scoped, tag = 'scoped memory for tpu_custom_call.1']
    #allocation4 [shape = 's32[2]{0}', space=sflag, size = 0x8, scoped, tag = 'scoped memory for tpu_custom_call.1']
    #allocation5 [shape = 'u8[131072]{0}', space=vmem, size = 0x20000, scoped, tag = 'input window, operand 1']
    #allocation6 [shape = 's32[2]{0}', space=sflag, size = 0x8, scoped, tag = 'scoped memory for tpu_custom_call.1']
    #allocation7 [shape = 'u8[196608]{0}', space=vmem, size = 0x30000, scoped, tag = 'input window, operand 2, single buffered']
    #allocation8 [shape = 'u8[196608]{0}', space=vmem, size = 0x30000, scoped, tag = 'input window, operand 4, single buffered']
    #allocation9 [shape = 's32[1]{0}', space=sflag, size = 0x4, scoped, tag = 'scoped memory for tpu_custom_call.1']
    #allocation10 [shape = 'u8[131072]{0}', space=vmem, size = 0x20000, scoped, tag = 'output window, operand 0']
    %13 = vsyncpa [#allocation3], 0
    %s14 = scalar_lea.sflag [#allocation3], 1
    %15 = vsyncpa %s14, 0
    %16 = vsyncpa [#allocation6], 0
    %s17 = scalar_lea.sflag [#allocation6], 1
    %18 = vsyncpa %s17, 0
    %19 = vsyncpa [#allocation9], 0
    %20 = vsyncpa [#allocation4], 0
    %s21 = scalar_lea.sflag [#allocation4], 1
    %22 = vsyncpa %s21, 0
    loop: start=0, step=1, limit=4
    $region2: #{tpu_custom_call.1} parent=1 // loop_pre_header
      _
    $region3: #{tpu_custom_call.1} parent=1 // loop_header
      %s24 = sphi 0, %s28
      %p25 = scmp.ge.s32.totalorder %s24, 4
      %s34 = sphi 0, %s36
      %s37 = sphi 0, %s34
      %s38 = sphi 0, %s37
      %s54 = sphi 0, %s38
      %s60 = sphi 0, %s62
      %s63 = sphi 0, %s60
      %s64 = sphi 0, %s63
      %s80 = sphi 0, %s64
      %s84 = sphi 0, %s84
      %s86 = sphi 0, %s84
      %s87 = sphi 0, %s86
      %s101 = sphi 0, %s87
      %s105 = sphi 0, %s105
      %s107 = sphi 0, %s105
      %s108 = sphi 0, %s107
      %s122 = sphi 0, %s108
      %s126 = sphi 0, %s126
      %s128 = sphi 0, %s126
      %s129 = sphi 0, %s128
      %s143 = sphi 0, %s129
      %s147 = sphi 0, %s147
      %s149 = sphi 0, %s147
      %s150 = sphi 0, %s149
      %s164 = sphi 0, %s150
      %s168 = sphi 0, %s168
      %s170 = sphi 0, %s168
      %s171 = sphi 0, %s170
      %s185 = sphi 0, %s171
      %s189 = sphi 0, %s189
      %s191 = sphi 0, %s189
      %s192 = sphi 0, %s191
      %s206 = sphi 0, %s192
      %s212 = sphi 0, %s214
      %s215 = sphi 0, %s212
      %s216 = sphi 0, %s215
      %s232 = sphi 0, %s216
    $region4: #{tpu_custom_call.1} parent=1 // loop_header_branch
      %27 = sbr.rel (%p25) target = $region8
    $region5: #{tpu_custom_call.1} parent=1 // loop_body
      %s29 = ssub.s32 %s24, 1
      %s30 = ssub.s32 %s24, 2
      %s31 = sadd.s32 %s24, 1
      %s32 = ssub.s32 %s24, %s31
      %p33 = scmp.eq.s32.totalorder %s32, 0
      %s35 = sadd.s32 %s34, 1
      %s36 = scalar_select %p33, %s34, %s35
      %p39 = pneg %p33
      %p40 = scmp.eq.s32.totalorder %s24, 1
      %p41 = por %p39, %p40
      %p42 = scmp.ne.s32.totalorder %s34, %s37
      %p43 = scmp.eq.s32.totalorder %s24, 0
      %p44 = por %p42, %p43
      %p45 = scmp.ne.s32.totalorder %s34, %s37
      %p46 = scmp.eq.s32.totalorder %s29, 1
      %p47 = por %p45, %p46
      %p48 = scmp.ne.s32.totalorder %s37, %s38
      %p49 = scmp.eq.s32.totalorder %s29, 0
      %p50 = por %p48, %p49
      %p51 = scmp.ne.s32.totalorder %s37, %s38
      %p52 = scmp.eq.s32.totalorder %s30, 1
      %p53 = por %p51, %p52
      %p55 = scmp.ne.s32.totalorder %s38, %s54
      %p56 = scmp.eq.s32.totalorder %s30, 0
      %p57 = por %p55, %p56
      %s58 = ssub.s32 %s24, %s31
      %p59 = scmp.eq.s32.totalorder %s58, 0
      %s61 = sadd.s32 %s60, 1
      %s62 = scalar_select %p59, %s60, %s61
      %p65 = pneg %p59
      %p66 = scmp.eq.s32.totalorder %s24, 1
      %p67 = por %p65, %p66
      %p68 = scmp.ne.s32.totalorder %s60, %s63
      %p69 = scmp.eq.s32.totalorder %s24, 0
      %p70 = por %p68, %p69
      %p71 = scmp.ne.s32.totalorder %s60, %s63
      %p72 = scmp.eq.s32.totalorder %s29, 1
      %p73 = por %p71, %p72
      %p74 = scmp.ne.s32.totalorder %s63, %s64
      %p75 = scmp.eq.s32.totalorder %s29, 0
      %p76 = por %p74, %p75
      %p77 = scmp.ne.s32.totalorder %s63, %s64
      %p78 = scmp.eq.s32.totalorder %s30, 1
      %p79 = por %p77, %p78
      %p81 = scmp.ne.s32.totalorder %s64, %s80
      %p82 = scmp.eq.s32.totalorder %s30, 0
      %p83 = por %p81, %p82
      %s85 = sadd.s32 %s84, 1
      %p88 = scmp.eq.s32.totalorder %s24, 1
      %p89 = scmp.ne.s32.totalorder %s84, %s86
      %p90 = scmp.eq.s32.totalorder %s24, 0
      %p91 = por %p89, %p90
      %p92 = scmp.ne.s32.totalorder %s84, %s86
      %p93 = scmp.eq.s32.totalorder %s29, 1
      %p94 = por %p92, %p93
      %p95 = scmp.ne.s32.totalorder %s86, %s87
      %p96 = scmp.eq.s32.totalorder %s29, 0
      %p97 = por %p95, %p96
      %p98 = scmp.ne.s32.totalorder %s86, %s87
      %p99 = scmp.eq.s32.totalorder %s30, 1
      %p100 = por %p98, %p99
      %p102 = scmp.ne.s32.totalorder %s87, %s101
      %p103 = scmp.eq.s32.totalorder %s30, 0
      %p104 = por %p102, %p103
      %s106 = sadd.s32 %s105, 1
      %p109 = scmp.eq.s32.totalorder %s24, 1
      %p110 = scmp.ne.s32.totalorder %s105, %s107
      %p111 = scmp.eq.s32.totalorder %s24, 0
      %p112 = por %p110, %p111
      %p113 = scmp.ne.s32.totalorder %s105, %s107
      %p114 = scmp.eq.s32.totalorder %s29, 1
      %p115 = por %p113, %p114
      %p116 = scmp.ne.s32.totalorder %s107, %s108
      %p117 = scmp.eq.s32.totalorder %s29, 0
      %p118 = por %p116, %p117
      %p119 = scmp.ne.s32.totalorder %s107, %s108
      %p120 = scmp.eq.s32.totalorder %s30, 1
      %p121 = por %p119, %p120
      %p123 = scmp.ne.s32.totalorder %s108, %s122
      %p124 = scmp.eq.s32.totalorder %s30, 0
      %p125 = por %p123, %p124
      %s127 = sadd.s32 %s126, 1
      %p130 = scmp.eq.s32.totalorder %s24, 1
      %p131 = scmp.ne.s32.totalorder %s126, %s128
      %p132 = scmp.eq.s32.totalorder %s24, 0
      %p133 = por %p131, %p132
      %p134 = scmp.ne.s32.totalorder %s126, %s128
      %p135 = scmp.eq.s32.totalorder %s29, 1
      %p136 = por %p134, %p135
      %p137 = scmp.ne.s32.totalorder %s128, %s129
      %p138 = scmp.eq.s32.totalorder %s29, 0
      %p139 = por %p137, %p138
      %p140 = scmp.ne.s32.totalorder %s128, %s129
      %p141 = scmp.eq.s32.totalorder %s30, 1
      %p142 = por %p140, %p141
      %p144 = scmp.ne.s32.totalorder %s129, %s143
      %p145 = scmp.eq.s32.totalorder %s30, 0
      %p146 = por %p144, %p145
      %s148 = sadd.s32 %s147, 1
      %p151 = scmp.eq.s32.totalorder %s24, 1
      %p152 = scmp.ne.s32.totalorder %s147, %s149
      %p153 = scmp.eq.s32.totalorder %s24, 0
      %p154 = por %p152, %p153
      %p155 = scmp.ne.s32.totalorder %s147, %s149
      %p156 = scmp.eq.s32.totalorder %s29, 1
      %p157 = por %p155, %p156
      %p158 = scmp.ne.s32.totalorder %s149, %s150
      %p159 = scmp.eq.s32.totalorder %s29, 0
      %p160 = por %p158, %p159
      %p161 = scmp.ne.s32.totalorder %s149, %s150
      %p162 = scmp.eq.s32.totalorder %s30, 1
      %p163 = por %p161, %p162
      %p165 = scmp.ne.s32.totalorder %s150, %s164
      %p166 = scmp.eq.s32.totalorder %s30, 0
      %p167 = por %p165, %p166
      %s169 = sadd.s32 %s168, 1
      %p172 = scmp.eq.s32.totalorder %s24, 1
      %p173 = scmp.ne.s32.totalorder %s168, %s170
      %p174 = scmp.eq.s32.totalorder %s24, 0
      %p175 = por %p173, %p174
      %p176 = scmp.ne.s32.totalorder %s168, %s170
      %p177 = scmp.eq.s32.totalorder %s29, 1
      %p178 = por %p176, %p177
      %p179 = scmp.ne.s32.totalorder %s170, %s171
      %p180 = scmp.eq.s32.totalorder %s29, 0
      %p181 = por %p179, %p180
      %p182 = scmp.ne.s32.totalorder %s170, %s171
      %p183 = scmp.eq.s32.totalorder %s30, 1
      %p184 = por %p182, %p183
      %p186 = scmp.ne.s32.totalorder %s171, %s185
      %p187 = scmp.eq.s32.totalorder %s30, 0
      %p188 = por %p186, %p187
      %s190 = sadd.s32 %s189, 1
      %p193 = scmp.eq.s32.totalorder %s24, 1
      %p194 = scmp.ne.s32.totalorder %s189, %s191
      %p195 = scmp.eq.s32.totalorder %s24, 0
      %p196 = por %p194, %p195
      %p197 = scmp.ne.s32.totalorder %s189, %s191
      %p198 = scmp.eq.s32.totalorder %s29, 1
      %p199 = por %p197, %p198
      %p200 = scmp.ne.s32.totalorder %s191, %s192
      %p201 = scmp.eq.s32.totalorder %s29, 0
      %p202 = por %p200, %p201
      %p203 = scmp.ne.s32.totalorder %s191, %s192
      %p204 = scmp.eq.s32.totalorder %s30, 1
      %p205 = por %p203, %p204
      %p207 = scmp.ne.s32.totalorder %s192, %s206
      %p208 = scmp.eq.s32.totalorder %s30, 0
      %p209 = por %p207, %p208
      %s210 = ssub.s32 %s24, %s31
      %p211 = scmp.eq.s32.totalorder %s210, 0
      %s213 = sadd.s32 %s212, 1
      %s214 = scalar_select %p211, %s212, %s213
      %p217 = pneg %p211
      %p218 = scmp.eq.s32.totalorder %s24, 1
      %p219 = por %p217, %p218
      %p220 = scmp.ne.s32.totalorder %s212, %s215
      %p221 = scmp.eq.s32.totalorder %s24, 0
      %p222 = por %p220, %p221
      %p223 = scmp.ne.s32.totalorder %s212, %s215
      %p224 = scmp.eq.s32.totalorder %s29, 1
      %p225 = por %p223, %p224
      %p226 = scmp.ne.s32.totalorder %s215, %s216
      %p227 = scmp.eq.s32.totalorder %s29, 0
      %p228 = por %p226, %p227
      %p229 = scmp.ne.s32.totalorder %s215, %s216
      %p230 = scmp.eq.s32.totalorder %s30, 1
      %p231 = por %p229, %p230
      %p233 = scmp.ne.s32.totalorder %s216, %s232
      %p234 = scmp.eq.s32.totalorder %s30, 0
      %p235 = por %p233, %p234
      %p236 = scmp.le.s32.totalorder 1, %s24
      %p237 = scmp.lt.s32.totalorder %s24, 3
      %p238 = pnand %p236, %p237
      %p239 = pneg %p238
      // Predicated region
      $region9: #{tpu_custom_call.1} parent=5 // pred_check
        _
      $region10: #{tpu_custom_call.1} parent=5 // pred_check_branch
        %241 = sbr.rel (%p238) target = $region12
      $region11: #{tpu_custom_call.1} parent=5 // pred_region
        %s242 = ssub.s32 %s24, 1
        // Predicated region
        $region13: #{tpu_custom_call.1} parent=11 // pred_check
          %p243 = pneg %p97
        $region14: #{tpu_custom_call.1} parent=11 // pred_check_branch
          %245 = sbr.rel (%p243) target = $region16
        $region15: #{tpu_custom_call.1} parent=11 // pred_region
          %s247 = ssub.s32 6144, 6144
          %248 = vsyncadd [#allocation6], %s247
          %s249 = sshll.u32 [#allocation7], 4
          %s250 = int_to_ptr.vmem [resolvable:$true] %s249
          %255 = dma.hbm_to_vmem [thread:$0]  %s2, 6144, %s250, [#allocation6], 384, 384, 24
        $region16: #{tpu_custom_call.1} parent=11 // pred_fallthru
          _
        // Predicated region
        $region17: #{tpu_custom_call.1} parent=11 // pred_check
          %p256 = pneg %p118
        $region18: #{tpu_custom_call.1} parent=11 // pred_check_branch
          %258 = sbr.rel (%p256) target = $region20
        $region19: #{tpu_custom_call.1} parent=11 // pred_region
          _
        $region20: #{tpu_custom_call.1} parent=11 // pred_fallthru
          _
        // Predicated region
        $region21: #{tpu_custom_call.1} parent=11 // pred_check
          %p259 = pneg %p139
        $region22: #{tpu_custom_call.1} parent=11 // pred_check_branch
          %261 = sbr.rel (%p259) target = $region24
        $region23: #{tpu_custom_call.1} parent=11 // pred_region
          %s263 = ssub.s32 6144, 6144
          %264 = vsyncadd [#allocation9], %s263
          %s265 = sshll.u32 [#allocation8], 4
          %s266 = int_to_ptr.vmem [resolvable:$true] %s265
          %271 = dma.hbm_to_vmem [thread:$0]  %s4, 6144, %s266, [#allocation9], 128, 128, 8
        $region24: #{tpu_custom_call.1} parent=11 // pred_fallthru
          _
        // Predicated region
        $region25: #{tpu_custom_call.1} parent=11 // pred_check
          %p272 = pneg %p160
        $region26: #{tpu_custom_call.1} parent=11 // pred_check_branch
          %274 = sbr.rel (%p272) target = $region28
        $region27: #{tpu_custom_call.1} parent=11 // pred_region
          _
        $region28: #{tpu_custom_call.1} parent=11 // pred_fallthru
          _
        // Predicated region
        $region29: #{tpu_custom_call.1} parent=11 // pred_check
          %p275 = pneg %p181
        $region30: #{tpu_custom_call.1} parent=11 // pred_check_branch
          %277 = sbr.rel (%p275) target = $region32
        $region31: #{tpu_custom_call.1} parent=11 // pred_region
          _
        $region32: #{tpu_custom_call.1} parent=11 // pred_fallthru
          _
        // Predicated region
        $region33: #{tpu_custom_call.1} parent=11 // pred_check
          %p278 = pneg %p202
        $region34: #{tpu_custom_call.1} parent=11 // pred_check_branch
          %280 = sbr.rel (%p278) target = $region36
        $region35: #{tpu_custom_call.1} parent=11 // pred_region
          _
        $region36: #{tpu_custom_call.1} parent=11 // pred_fallthru
          _
      $region12: #{tpu_custom_call.1} parent=5 // pred_fallthru
        _
      %p281 = scmp.lt.s32.totalorder %s24, 2
      // Predicated region
      $region37: #{tpu_custom_call.1} parent=5 // pred_check
        %p282 = pneg %p281
      $region38: #{tpu_custom_call.1} parent=5 // pred_check_branch
        %284 = sbr.rel (%p282) target = $region40
      $region39: #{tpu_custom_call.1} parent=5 // pred_region
        // Predicated region
        $region41: #{tpu_custom_call.1} parent=39 // pred_check
          %p285 = pneg %p44
        $region42: #{tpu_custom_call.1} parent=39 // pred_check_branch
          %287 = sbr.rel (%p285) target = $region44
        $region43: #{tpu_custom_call.1} parent=39 // pred_region
          %s288 = sand.u32 %s34, 1
          %s289 = scalar_lea.sflag [#allocation3], %s288
          %s290 = sand.u32 %s34, 1
          %s291 = smul.addr %s290, 128
          %s292 = scalar_lea.vmem [#allocation2], %s291
          %s293 = smul.u32 16, %s24
          %s295 = ssub.s32 2048, 2048
          %296 = vsyncadd %s289, %s295
          %s297 = smul.addr %s293, 128
          %s298 = scalar_lea.hbm %s0, %s297
          %s299 = sshll.u32 %s292, 4
          %s300 = int_to_ptr.vmem [resolvable:$true] %s299
          %305 = dma.hbm_to_vmem [thread:$0]  %s298, 2048, %s300, %s289, 128, 128, 8
        $region44: #{tpu_custom_call.1} parent=39 // pred_fallthru
          _
        // Predicated region
        $region45: #{tpu_custom_call.1} parent=39 // pred_check
          %p306 = pneg %p70
        $region46: #{tpu_custom_call.1} parent=39 // pred_check_branch
          %308 = sbr.rel (%p306) target = $region48
        $region47: #{tpu_custom_call.1} parent=39 // pred_region
          %s309 = sand.u32 %s24, 1
          %s310 = scalar_lea.sflag [#allocation6], %s309
          %s311 = sand.u32 %s60, 1
          %s312 = smul.addr %s311, 128
          %s313 = scalar_lea.vmem [#allocation5], %s312
          %s314 = smul.u32 16, %s24
          %s316 = ssub.s32 2048, 2048
          %317 = vsyncadd %s310, %s316
          %s318 = smul.addr %s314, 128
          %s319 = scalar_lea.hbm %s1, %s318
          %s320 = sshll.u32 %s313, 4
          %s321 = int_to_ptr.vmem [resolvable:$true] %s320
          %326 = dma.hbm_to_vmem [thread:$0]  %s319, 2048, %s321, %s310, 128, 128, 8
        $region48: #{tpu_custom_call.1} parent=39 // pred_fallthru
          _
      $region40: #{tpu_custom_call.1} parent=5 // pred_fallthru
        _
      %p327 = scmp.le.s32.totalorder 1, %s24
      %p328 = scmp.lt.s32.totalorder %s24, 3
      %p329 = pnand %p327, %p328
      %p330 = pneg %p329
      // Predicated region
      $region49: #{tpu_custom_call.1} parent=5 // pred_check
        _
      $region50: #{tpu_custom_call.1} parent=5 // pred_check_branch
        %332 = sbr.rel (%p329) target = $region52
      $region51: #{tpu_custom_call.1} parent=5 // pred_region
        %s333 = ssub.s32 %s24, 1
        %s334 = sand.u32 %s37, 1
        %s335 = scalar_lea.sflag [#allocation3], %s334
        %s336 = sand.u32 %s37, 1
        %s337 = smul.addr %s336, 128
        %s338 = scalar_lea.vmem [#allocation2], %s337
        // Predicated region
        $region53: #{tpu_custom_call.1} parent=51 // pred_check
          %p339 = pneg %p50
        $region54: #{tpu_custom_call.1} parent=51 // pred_check_branch
          %341 = sbr.rel (%p339) target = $region56
        $region55: #{tpu_custom_call.1} parent=51 // pred_region
          %342 = dma.done %s335, 2048
        $region56: #{tpu_custom_call.1} parent=51 // pred_fallthru
          _
        %s343 = sand.u32 %s29, 1
        %s344 = scalar_lea.sflag [#allocation6], %s343
        %s345 = sand.u32 %s63, 1
        %s346 = smul.addr %s345, 128
        %s347 = scalar_lea.vmem [#allocation5], %s346
        // Predicated region
        $region57: #{tpu_custom_call.1} parent=51 // pred_check
          %p348 = pneg %p76
        $region58: #{tpu_custom_call.1} parent=51 // pred_check_branch
          %350 = sbr.rel (%p348) target = $region60
        $region59: #{tpu_custom_call.1} parent=51 // pred_region
          %351 = dma.done %s344, 2048
        $region60: #{tpu_custom_call.1} parent=51 // pred_fallthru
          _
        // Predicated region
        $region61: #{tpu_custom_call.1} parent=51 // pred_check
          %p352 = pneg %p97
        $region62: #{tpu_custom_call.1} parent=51 // pred_check_branch
          %354 = sbr.rel (%p352) target = $region64
        $region63: #{tpu_custom_call.1} parent=51 // pred_region
          %355 = dma.done [#allocation6], 6144
        $region64: #{tpu_custom_call.1} parent=51 // pred_fallthru
          _
        // Predicated region
        $region65: #{tpu_custom_call.1} parent=51 // pred_check
          %p356 = pneg %p139
        $region66: #{tpu_custom_call.1} parent=51 // pred_check_branch
          %358 = sbr.rel (%p356) target = $region68
        $region67: #{tpu_custom_call.1} parent=51 // pred_region
          %359 = dma.done [#allocation9], 6144
        $region68: #{tpu_custom_call.1} parent=51 // pred_fallthru
          _
        %s360 = sand.u32 %s37, 1
        %s361 = scalar_lea.sflag [#allocation3], %s360
        %s362 = sand.u32 %s37, 1
        %s363 = smul.addr %s362, 128
        %s364 = scalar_lea.vmem [#allocation2], %s363
        %p365 = pneg %p50
        %p366 = pneg %p47
        %s367 = sand.u32 %s29, 1
        %s368 = scalar_lea.sflag [#allocation6], %s367
        %s369 = sand.u32 %s63, 1
        %s370 = smul.addr %s369, 128
        %s371 = scalar_lea.vmem [#allocation5], %s370
        %p372 = pneg %p76
        %p373 = pneg %p73
        %p374 = pneg %p97
        %p375 = pneg %p94
        %p376 = pneg %p118
        %p377 = pneg %p115
        %p378 = pneg %p139
        %p379 = pneg %p136
        %p380 = pneg %p160
        %p381 = pneg %p157
        %p382 = pneg %p181
        %p383 = pneg %p178
        %p384 = pneg %p202
        %p385 = pneg %p199
        %p386 = pneg %p228
        %p387 = pneg %p225
        %s388 = sand.u32 %s215, 1
        %s389 = scalar_lea.sflag [#allocation4], %s388
        %s390 = sand.u32 %s215, 1
        %s391 = smul.addr %s390, 128
        %s392 = scalar_lea.vmem [#allocation10], %s391
        %s393 = smul.u32 16, %s29
        %s394 = smul.u32 16, %s29
        %s395 = smul.u32 16, %s29
        %v396 = vld [vmem:[%s338] sm:$0xff]
        %v397 = vld [vmem:[%s338 + $0x8] sm:$0xff]
        %v398 = vld [vmem:[%s338 + $0x10] sm:$0xff]
        %v399 = vld [vmem:[%s338 + $0x18] sm:$0xff]
        %v400 = vld [vmem:[%s338 + $0x20] sm:$0xff]
        %v401 = vld [vmem:[%s338 + $0x28] sm:$0xff]
        %v402 = vld [vmem:[%s338 + $0x30] sm:$0xff]
        %v403 = vld [vmem:[%s338 + $0x38] sm:$0xff]
        %v404 = vld [vmem:[%s338 + $0x40] sm:$0xff]
        %v405 = vld [vmem:[%s338 + $0x48] sm:$0xff]
        %v406 = vld [vmem:[%s338 + $0x50] sm:$0xff]
        %v407 = vld [vmem:[%s338 + $0x58] sm:$0xff]
        %v408 = vld [vmem:[%s338 + $0x60] sm:$0xff]
        %v409 = vld [vmem:[%s338 + $0x68] sm:$0xff]
        %v410 = vld [vmem:[%s338 + $0x70] sm:$0xff]
        %v411 = vld [vmem:[%s338 + $0x78] sm:$0xff]
        %v412 = vld [vmem:[#allocation7] sm:$0xff]
        %v413 = vld [vmem:[#allocation7 + $0x8] sm:$0xff]
        %v414 = vld [vmem:[#allocation7 + $0x10] sm:$0xff]
        %v415 = vld [vmem:[#allocation7 + $0x18] sm:$0xff]
        %v416 = vld [vmem:[#allocation7 + $0x20] sm:$0xff]
        %v417 = vld [vmem:[#allocation7 + $0x28] sm:$0xff]
        %v418 = vld [vmem:[#allocation7 + $0x30] sm:$0xff]
        %v419 = vld [vmem:[#allocation7 + $0x38] sm:$0xff]
        %v420 = vld [vmem:[#allocation7 + $0x40] sm:$0xff]
        %v421 = vld [vmem:[#allocation7 + $0x48] sm:$0xff]
        %v422 = vld [vmem:[#allocation7 + $0x50] sm:$0xff]
        %v423 = vld [vmem:[#allocation7 + $0x58] sm:$0xff]
        %v424 = vld [vmem:[#allocation7 + $0x60] sm:$0xff]
        %v425 = vld [vmem:[#allocation7 + $0x68] sm:$0xff]
        %v426 = vld [vmem:[#allocation7 + $0x70] sm:$0xff]
        %v427 = vld [vmem:[#allocation7 + $0x78] sm:$0xff]
        %v428 = vld [vmem:[#allocation7 + $0x80] sm:$0xff]
        %v429 = vld [vmem:[#allocation7 + $0x88] sm:$0xff]
        %v430 = vld [vmem:[#allocation7 + $0x90] sm:$0xff]
        %v431 = vld [vmem:[#allocation7 + $0x98] sm:$0xff]
        %v432 = vld [vmem:[#allocation7 + $0xa0] sm:$0xff]
        %v433 = vld [vmem:[#allocation7 + $0xa8] sm:$0xff]
        %v434 = vld [vmem:[#allocation7 + $0xb0] sm:$0xff]
        %v435 = vld [vmem:[#allocation7 + $0xb8] sm:$0xff]
        %v436 = vld [vmem:[#allocation7 + $0xc0] sm:$0xff]
        %v437 = vld [vmem:[#allocation7 + $0xc8] sm:$0xff]
        %v438 = vld [vmem:[#allocation7 + $0xd0] sm:$0xff]
        %v439 = vld [vmem:[#allocation7 + $0xd8] sm:$0xff]
        %v440 = vld [vmem:[#allocation7 + $0xe0] sm:$0xff]
        %v441 = vld [vmem:[#allocation7 + $0xe8] sm:$0xff]
        %v442 = vld [vmem:[#allocation7 + $0xf0] sm:$0xff]
        %v443 = vld [vmem:[#allocation7 + $0xf8] sm:$0xff]
        %v444 = vld [vmem:[#allocation7 + $0x100] sm:$0xff]
        %v445 = vld [vmem:[#allocation7 + $0x108] sm:$0xff]
        %v446 = vld [vmem:[#allocation7 + $0x110] sm:$0xff]
        %v447 = vld [vmem:[#allocation7 + $0x118] sm:$0xff]
        %v448 = vld [vmem:[#allocation7 + $0x120] sm:$0xff]
        %v449 = vld [vmem:[#allocation7 + $0x128] sm:$0xff]
        %v450 = vld [vmem:[#allocation7 + $0x130] sm:$0xff]
        %v451 = vld [vmem:[#allocation7 + $0x138] sm:$0xff]
        %v452 = vld [vmem:[#allocation7 + $0x140] sm:$0xff]
        %v453 = vld [vmem:[#allocation7 + $0x148] sm:$0xff]
        %v454 = vld [vmem:[#allocation7 + $0x150] sm:$0xff]
        %v455 = vld [vmem:[#allocation7 + $0x158] sm:$0xff]
        %v456 = vld [vmem:[#allocation7 + $0x160] sm:$0xff]
        %v457 = vld [vmem:[#allocation7 + $0x168] sm:$0xff]
        %v458 = vld [vmem:[#allocation7 + $0x170] sm:$0xff]
        %v459 = vld [vmem:[#allocation7 + $0x178] sm:$0xff]
        %v460 = vld [vmem:[%s3] sm:$0x7]
        %v462 = vlaneseq
        %v463 = vshrl.u32 %v462, 7
        %v464 = vsub.s32 0, %v463
        %v465 = vrot.slane %v460, %v464
        %v466 = vlaneseq
        %v467 = vshrl.u32 %v466, 7
        %v468 = vsub.s32 1, %v467
        %v469 = vrot.slane %v460, %v468
        %v470 = vlaneseq
        %v471 = vshrl.u32 %v470, 7
        %v472 = vsub.s32 2, %v471
        %v473 = vrot.slane %v460, %v472
        %477 = vmatprep.subr.mxu0 %v458
        %478 = vmatpush1.msra.mxu0 %v457
        %479 = vmatprep.subr.mxu0 %v455
        %480 = vmatpush1.msra.mxu0 %v454
        %481 = vmatprep.subr.mxu0 %v452
        %482 = vmatpush1.msra.mxu0 %v451
        %483 = vmatprep.subr.mxu0 %v449
        %484 = vmatpush1.msra.mxu0 %v448
        %485 = vmatprep.subr.mxu0 %v446
        %486 = vmatpush1.msra.mxu0 %v445
        %487 = vmatprep.subr.mxu0 %v443
        %488 = vmatpush1.msra.mxu0 %v442
        %489 = vmatprep.subr.mxu0 %v440
        %490 = vmatpush1.msra.mxu0 %v439
        %491 = vmatprep.subr.mxu0 %v437
        %492 = vmatpush1.msra.mxu0 %v436
        %493 = vmatprep.subr.mxu0 %v434
        %494 = vmatpush1.msra.mxu0 %v433
        %495 = vmatprep.subr.mxu0 %v431
        %496 = vmatpush1.msra.mxu0 %v430
        %497 = vmatprep.subr.mxu0 %v428
        %498 = vmatpush1.msra.mxu0 %v427
        %499 = vmatprep.subr.mxu0 %v425
        %500 = vmatpush1.msra.mxu0 %v424
        %501 = vmatprep.subr.mxu0 %v422
        %502 = vmatpush1.msra.mxu0 %v421
        %503 = vmatprep.subr.mxu0 %v419
        %504 = vmatpush1.msra.mxu0 %v418
        %505 = vmatprep.subr.mxu0 %v416
        %506 = vmatpush1.msra.mxu0 %v415
        %507 = vmatprep.subr.mxu0 %v413
        %508 = vmatpush1.msra.mxu0 %v412
        %509 = vmatprep.subr.mxu0 0.0
        %510 = vmatpush2.msra.mxu0 0.0
        %511 = vmatprep.subr.mxu0 0.0
        %512 = vmatpush2.msra.mxu0 0.0
        %513 = vmatprep.subr.mxu0 0.0
        %514 = vmatpush2.msra.mxu0 0.0
        %515 = vmatprep.subr.mxu0 0.0
        %516 = vmatpush2.msra.mxu0 0.0
        %517 = vmatprep.subr.mxu0 0.0
        %518 = vmatpush2.msra.mxu0 0.0
        %519 = vmatprep.subr.mxu0 0.0
        %520 = vmatpush2.msra.mxu0 0.0
        %521 = vmatprep.subr.mxu0 0.0
        %522 = vmatpush2.msra.mxu0 0.0
        %523 = vmatprep.subr.mxu0 0.0
        %524 = vmatpush2.msra.mxu0 0.0
        %525 = vmatprep.subr.mxu0 0.0
        %526 = vmatpush2.msra.mxu0 0.0
        %527 = vmatprep.subr.mxu0 0.0
        %528 = vmatpush2.msra.mxu0 0.0
        %529 = vmatprep.subr.mxu0 0.0
        %530 = vmatpush2.msra.mxu0 0.0
        %531 = vmatprep.subr.mxu0 0.0
        %532 = vmatpush2.msra.mxu0 0.0
        %533 = vmatprep.subr.mxu0 0.0
        %534 = vmatpush2.msra.mxu0 0.0
        %535 = vmatprep.subr.mxu0 0.0
        %536 = vmatpush2.msra.mxu0 0.0
        %537 = vmatprep.subr.mxu0 0.0
        %538 = vmatpush2.msra.mxu0 0.0
        %539 = vmatprep.subr.mxu0 0.0
        %540 = vmatpush2.msra.mxu0 0.0
        %541 = vmatprep.mubr.f32.mxu0 0.0
        %542 = vmatmul.mubr.f32.gmra.mxu0 %v396
        %v543 = vpop.f32.mrf.mxu0
        %v544 = vadd.f32 %v465, %v543
        %v545 = vpop.f32.mrf.mxu0
        %v546 = vadd.f32 %v469, %v545
        %547 = vmatprep.mubr.f32.mxu0 0.0
        %548 = vmatmul.mubr.f32.gmra.mxu0 %v397
        %v549 = vpop.f32.mrf.mxu0
        %v550 = vadd.f32 %v465, %v549
        %v551 = vpop.f32.mrf.mxu0
        %v552 = vadd.f32 %v469, %v551
        %553 = vmatprep.mubr.f32.mxu0 0.0
        %554 = vmatmul.mubr.f32.gmra.mxu0 %v398
        %v555 = vpop.f32.mrf.mxu0
        %v556 = vadd.f32 %v465, %v555
        %v557 = vpop.f32.mrf.mxu0
        %v558 = vadd.f32 %v469, %v557
        %559 = vmatprep.mubr.f32.mxu0 0.0
        %560 = vmatmul.mubr.f32.gmra.mxu0 %v399
        %v561 = vpop.f32.mrf.mxu0
        %v562 = vadd.f32 %v465, %v561
        %v563 = vpop.f32.mrf.mxu0
        %v564 = vadd.f32 %v469, %v563
        %565 = vmatprep.mubr.f32.mxu0 0.0
        %566 = vmatmul.mubr.f32.gmra.mxu0 %v400
        %v567 = vpop.f32.mrf.mxu0
        %v568 = vadd.f32 %v465, %v567
        %v569 = vpop.f32.mrf.mxu0
        %v570 = vadd.f32 %v469, %v569
        %571 = vmatprep.mubr.f32.mxu0 0.0
        %572 = vmatmul.mubr.f32.gmra.mxu0 %v401
        %v573 = vpop.f32.mrf.mxu0
        %v574 = vadd.f32 %v465, %v573
        %v575 = vpop.f32.mrf.mxu0
        %v576 = vadd.f32 %v469, %v575
        %577 = vmatprep.mubr.f32.mxu0 0.0
        %578 = vmatmul.mubr.f32.gmra.mxu0 %v402
        %v579 = vpop.f32.mrf.mxu0
        %v580 = vadd.f32 %v465, %v579
        %v581 = vpop.f32.mrf.mxu0
        %v582 = vadd.f32 %v469, %v581
        %583 = vmatprep.mubr.f32.mxu0 0.0
        %584 = vmatmul.mubr.f32.gmra.mxu0 %v403
        %v585 = vpop.f32.mrf.mxu0
        %v586 = vadd.f32 %v465, %v585
        %v587 = vpop.f32.mrf.mxu0
        %v588 = vadd.f32 %v469, %v587
        %589 = vmatprep.mubr.f32.mxu0 0.0
        %590 = vmatmul.mubr.f32.gmra.mxu0 %v404
        %v591 = vpop.f32.mrf.mxu0
        %v592 = vadd.f32 %v465, %v591
        %v593 = vpop.f32.mrf.mxu0
        %v594 = vadd.f32 %v469, %v593
        %595 = vmatprep.mubr.f32.mxu0 0.0
        %596 = vmatmul.mubr.f32.gmra.mxu0 %v405
        %v597 = vpop.f32.mrf.mxu0
        %v598 = vadd.f32 %v465, %v597
        %v599 = vpop.f32.mrf.mxu0
        %v600 = vadd.f32 %v469, %v599
        %601 = vmatprep.mubr.f32.mxu0 0.0
        %602 = vmatmul.mubr.f32.gmra.mxu0 %v406
        %v603 = vpop.f32.mrf.mxu0
        %v604 = vadd.f32 %v465, %v603
        %v605 = vpop.f32.mrf.mxu0
        %v606 = vadd.f32 %v469, %v605
        %607 = vmatprep.mubr.f32.mxu0 0.0
        %608 = vmatmul.mubr.f32.gmra.mxu0 %v407
        %v609 = vpop.f32.mrf.mxu0
        %v610 = vadd.f32 %v465, %v609
        %v611 = vpop.f32.mrf.mxu0
        %v612 = vadd.f32 %v469, %v611
        %613 = vmatprep.mubr.f32.mxu0 0.0
        %614 = vmatmul.mubr.f32.gmra.mxu0 %v408
        %v615 = vpop.f32.mrf.mxu0
        %v616 = vadd.f32 %v465, %v615
        %v617 = vpop.f32.mrf.mxu0
        %v618 = vadd.f32 %v469, %v617
        %619 = vmatprep.mubr.f32.mxu0 0.0
        %620 = vmatmul.mubr.f32.gmra.mxu0 %v409
        %v621 = vpop.f32.mrf.mxu0
        %v622 = vadd.f32 %v465, %v621
        %v623 = vpop.f32.mrf.mxu0
        %v624 = vadd.f32 %v469, %v623
        %625 = vmatprep.mubr.f32.mxu0 0.0
        %626 = vmatmul.mubr.f32.gmra.mxu0 %v410
        %v627 = vpop.f32.mrf.mxu0
        %v628 = vadd.f32 %v465, %v627
        %v629 = vpop.f32.mrf.mxu0
        %v630 = vadd.f32 %v469, %v629
        %631 = vmatprep.mubr.f32.mxu0 0.0
        %632 = vmatmul.mubr.f32.gmra.mxu0 %v411
        %v633 = vpop.f32.mrf.mxu0
        %v634 = vadd.f32 %v465, %v633
        %v635 = vpop.f32.mrf.mxu0
        %v636 = vadd.f32 %v469, %v635
        %637 = vdwg.mxu0
        %638 = vmatprep.subr.mxu0 0.0
        %639 = vmatpush1.msra.mxu0 %v459
        %640 = vmatprep.subr.mxu0 0.0
        %641 = vmatpush1.msra.mxu0 %v456
        %642 = vmatprep.subr.mxu0 0.0
        %643 = vmatpush1.msra.mxu0 %v453
        %644 = vmatprep.subr.mxu0 0.0
        %645 = vmatpush1.msra.mxu0 %v450
        %646 = vmatprep.subr.mxu0 0.0
        %647 = vmatpush1.msra.mxu0 %v447
        %648 = vmatprep.subr.mxu0 0.0
        %649 = vmatpush1.msra.mxu0 %v444
        %650 = vmatprep.subr.mxu0 0.0
        %651 = vmatpush1.msra.mxu0 %v441
        %652 = vmatprep.subr.mxu0 0.0
        %653 = vmatpush1.msra.mxu0 %v438
        %654 = vmatprep.subr.mxu0 0.0
        %655 = vmatpush1.msra.mxu0 %v435
        %656 = vmatprep.subr.mxu0 0.0
        %657 = vmatpush1.msra.mxu0 %v432
        %658 = vmatprep.subr.mxu0 0.0
        %659 = vmatpush1.msra.mxu0 %v429
        %660 = vmatprep.subr.mxu0 0.0
        %661 = vmatpush1.msra.mxu0 %v426
        %662 = vmatprep.subr.mxu0 0.0
        %663 = vmatpush1.msra.mxu0 %v423
        %664 = vmatprep.subr.mxu0 0.0
        %665 = vmatpush1.msra.mxu0 %v420
        %666 = vmatprep.subr.mxu0 0.0
        %667 = vmatpush1.msra.mxu0 %v417
        %668 = vmatprep.subr.mxu0 0.0
        %669 = vmatpush1.msra.mxu0 %v414
        %670 = vmatprep.subr.mxu0 0.0
        %671 = vmatpush2.msra.mxu0 0.0
        %672 = vmatprep.subr.mxu0 0.0
        %673 = vmatpush2.msra.mxu0 0.0
        %674 = vmatprep.subr.mxu0 0.0
        %675 = vmatpush2.msra.mxu0 0.0
        %676 = vmatprep.subr.mxu0 0.0
        %677 = vmatpush2.msra.mxu0 0.0
        %678 = vmatprep.subr.mxu0 0.0
        %679 = vmatpush2.msra.mxu0 0.0
        %680 = vmatprep.subr.mxu0 0.0
        %681 = vmatpush2.msra.mxu0 0.0
        %682 = vmatprep.subr.mxu0 0.0
        %683 = vmatpush2.msra.mxu0 0.0
        %684 = vmatprep.subr.mxu0 0.0
        %685 = vmatpush2.msra.mxu0 0.0
        %686 = vmatprep.subr.mxu0 0.0
        %687 = vmatpush2.msra.mxu0 0.0
        %688 = vmatprep.subr.mxu0 0.0
        %689 = vmatpush2.msra.mxu0 0.0
        %690 = vmatprep.subr.mxu0 0.0
        %691 = vmatpush2.msra.mxu0 0.0
        %692 = vmatprep.subr.mxu0 0.0
        %693 = vmatpush2.msra.mxu0 0.0
        %694 = vmatprep.subr.mxu0 0.0
        %695 = vmatpush2.msra.mxu0 0.0
        %696 = vmatprep.subr.mxu0 0.0
        %697 = vmatpush2.msra.mxu0 0.0
        %698 = vmatprep.subr.mxu0 0.0
        %699 = vmatpush2.msra.mxu0 0.0
        %700 = vmatprep.subr.mxu0 0.0
        %701 = vmatpush2.msra.mxu0 0.0
        %702 = vmatprep.mubr.f32.mxu0 0.0
        %703 = vmatmul.mubr.f32.gmra.mxu0 %v396
        %v704 = vpop.f32.mrf.mxu0
        %v705 = vadd.f32 %v473, %v704
        %v706 = vpop.f32.mrf.mxu0
        %707 = vmatprep.mubr.f32.mxu0 0.0
        %708 = vmatmul.mubr.f32.gmra.mxu0 %v397
        %v709 = vpop.f32.mrf.mxu0
        %v710 = vadd.f32 %v473, %v709
        %v711 = vpop.f32.mrf.mxu0
        %712 = vmatprep.mubr.f32.mxu0 0.0
        %713 = vmatmul.mubr.f32.gmra.mxu0 %v398
        %v714 = vpop.f32.mrf.mxu0
        %v715 = vadd.f32 %v473, %v714
        %v716 = vpop.f32.mrf.mxu0
        %717 = vmatprep.mubr.f32.mxu0 0.0
        %718 = vmatmul.mubr.f32.gmra.mxu0 %v399
        %v719 = vpop.f32.mrf.mxu0
        %v720 = vadd.f32 %v473, %v719
        %v721 = vpop.f32.mrf.mxu0
        %722 = vmatprep.mubr.f32.mxu0 0.0
        %723 = vmatmul.mubr.f32.gmra.mxu0 %v400
        %v724 = vpop.f32.mrf.mxu0
        %v725 = vadd.f32 %v473, %v724
        %v726 = vpop.f32.mrf.mxu0
        %727 = vmatprep.mubr.f32.mxu0 0.0
        %728 = vmatmul.mubr.f32.gmra.mxu0 %v401
        %v729 = vpop.f32.mrf.mxu0
        %v730 = vadd.f32 %v473, %v729
        %v731 = vpop.f32.mrf.mxu0
        %732 = vmatprep.mubr.f32.mxu0 0.0
        %733 = vmatmul.mubr.f32.gmra.mxu0 %v402
        %v734 = vpop.f32.mrf.mxu0
        %v735 = vadd.f32 %v473, %v734
        %v736 = vpop.f32.mrf.mxu0
        %737 = vmatprep.mubr.f32.mxu0 0.0
        %738 = vmatmul.mubr.f32.gmra.mxu0 %v403
        %v739 = vpop.f32.mrf.mxu0
        %v740 = vadd.f32 %v473, %v739
        %v741 = vpop.f32.mrf.mxu0
        %742 = vmatprep.mubr.f32.mxu0 0.0
        %743 = vmatmul.mubr.f32.gmra.mxu0 %v404
        %v744 = vpop.f32.mrf.mxu0
        %v745 = vadd.f32 %v473, %v744
        %v746 = vpop.f32.mrf.mxu0
        %747 = vmatprep.mubr.f32.mxu0 0.0
        %748 = vmatmul.mubr.f32.gmra.mxu0 %v405
        %v749 = vpop.f32.mrf.mxu0
        %v750 = vadd.f32 %v473, %v749
        %v751 = vpop.f32.mrf.mxu0
        %752 = vmatprep.mubr.f32.mxu0 0.0
        %753 = vmatmul.mubr.f32.gmra.mxu0 %v406
        %v754 = vpop.f32.mrf.mxu0
        %v755 = vadd.f32 %v473, %v754
        %v756 = vpop.f32.mrf.mxu0
        %757 = vmatprep.mubr.f32.mxu0 0.0
        %758 = vmatmul.mubr.f32.gmra.mxu0 %v407
        %v759 = vpop.f32.mrf.mxu0
        %v760 = vadd.f32 %v473, %v759
        %v761 = vpop.f32.mrf.mxu0
        %762 = vmatprep.mubr.f32.mxu0 0.0
        %763 = vmatmul.mubr.f32.gmra.mxu0 %v408
        %v764 = vpop.f32.mrf.mxu0
        %v765 = vadd.f32 %v473, %v764
        %v766 = vpop.f32.mrf.mxu0
        %767 = vmatprep.mubr.f32.mxu0 0.0
        %768 = vmatmul.mubr.f32.gmra.mxu0 %v409
        %v769 = vpop.f32.mrf.mxu0
        %v770 = vadd.f32 %v473, %v769
        %v771 = vpop.f32.mrf.mxu0
        %772 = vmatprep.mubr.f32.mxu0 0.0
        %773 = vmatmul.mubr.f32.gmra.mxu0 %v410
        %v774 = vpop.f32.mrf.mxu0
        %v775 = vadd.f32 %v473, %v774
        %v776 = vpop.f32.mrf.mxu0
        %777 = vmatprep.mubr.f32.mxu0 0.0
        %778 = vmatmul.mubr.f32.gmra.mxu0 %v411
        %v779 = vpop.f32.mrf.mxu0
        %v780 = vadd.f32 %v473, %v779
        %v781 = vpop.f32.mrf.mxu0
        %782 = vdwg.mxu0
        %v783 = vmax.f32 %v544, 0.0
        %v784 = vmax.f32 %v546, 0.0
        %v785 = vmax.f32 %v705, 0.0
        %v786 = vmax.f32 %v550, 0.0
        %v787 = vmax.f32 %v552, 0.0
        %v788 = vmax.f32 %v710, 0.0
        %v789 = vmax.f32 %v556, 0.0
        %v790 = vmax.f32 %v558, 0.0
        %v791 = vmax.f32 %v715, 0.0
        %v792 = vmax.f32 %v562, 0.0
        %v793 = vmax.f32 %v564, 0.0
        %v794 = vmax.f32 %v720, 0.0
        %v795 = vmax.f32 %v568, 0.0
        %v796 = vmax.f32 %v570, 0.0
        %v797 = vmax.f32 %v725, 0.0
        %v798 = vmax.f32 %v574, 0.0
        %v799 = vmax.f32 %v576, 0.0
        %v800 = vmax.f32 %v730, 0.0
        %v801 = vmax.f32 %v580, 0.0
        %v802 = vmax.f32 %v582, 0.0
        %v803 = vmax.f32 %v735, 0.0
        %v804 = vmax.f32 %v586, 0.0
        %v805 = vmax.f32 %v588, 0.0
        %v806 = vmax.f32 %v740, 0.0
        %v807 = vmax.f32 %v592, 0.0
        %v808 = vmax.f32 %v594, 0.0
        %v809 = vmax.f32 %v745, 0.0
        %v810 = vmax.f32 %v598, 0.0
        %v811 = vmax.f32 %v600, 0.0
        %v812 = vmax.f32 %v750, 0.0
        %v813 = vmax.f32 %v604, 0.0
        %v814 = vmax.f32 %v606, 0.0
        %v815 = vmax.f32 %v755, 0.0
        %v816 = vmax.f32 %v610, 0.0
        %v817 = vmax.f32 %v612, 0.0
        %v818 = vmax.f32 %v760, 0.0
        %v819 = vmax.f32 %v616, 0.0
        %v820 = vmax.f32 %v618, 0.0
        %v821 = vmax.f32 %v765, 0.0
        %v822 = vmax.f32 %v622, 0.0
        %v823 = vmax.f32 %v624, 0.0
        %v824 = vmax.f32 %v770, 0.0
        %v825 = vmax.f32 %v628, 0.0
        %v826 = vmax.f32 %v630, 0.0
        %v827 = vmax.f32 %v775, 0.0
        %v828 = vmax.f32 %v634, 0.0
        %v829 = vmax.f32 %v636, 0.0
        %v830 = vmax.f32 %v780, 0.0
        %v831 = vld [vmem:[#allocation8] sm:$0xff]
        %v832 = vld [vmem:[#allocation8 + $0x8] sm:$0xff]
        %v833 = vld [vmem:[#allocation8 + $0x10] sm:$0xff]
        %v834 = vld [vmem:[#allocation8 + $0x18] sm:$0xff]
        %v835 = vld [vmem:[#allocation8 + $0x20] sm:$0xff]
        %v836 = vld [vmem:[#allocation8 + $0x28] sm:$0xff]
        %v837 = vld [vmem:[#allocation8 + $0x30] sm:$0xff]
        %v838 = vld [vmem:[#allocation8 + $0x38] sm:$0xff]
        %v839 = vld [vmem:[#allocation8 + $0x40] sm:$0xff]
        %v840 = vld [vmem:[#allocation8 + $0x48] sm:$0xff]
        %v841 = vld [vmem:[#allocation8 + $0x50] sm:$0xff]
        %v842 = vld [vmem:[#allocation8 + $0x58] sm:$0xff]
        %v843 = vld [vmem:[#allocation8 + $0x60] sm:$0xff]
        %v844 = vld [vmem:[#allocation8 + $0x68] sm:$0xff]
        %v845 = vld [vmem:[#allocation8 + $0x70] sm:$0xff]
        %v846 = vld [vmem:[#allocation8 + $0x78] sm:$0xff]
        %v847 = vld [vmem:[#allocation8 + $0x80] sm:$0xff]
        %v848 = vld [vmem:[#allocation8 + $0x88] sm:$0xff]
        %v849 = vld [vmem:[#allocation8 + $0x90] sm:$0xff]
        %v850 = vld [vmem:[#allocation8 + $0x98] sm:$0xff]
        %v851 = vld [vmem:[#allocation8 + $0xa0] sm:$0xff]
        %v852 = vld [vmem:[#allocation8 + $0xa8] sm:$0xff]
        %v853 = vld [vmem:[#allocation8 + $0xb0] sm:$0xff]
        %v854 = vld [vmem:[#allocation8 + $0xb8] sm:$0xff]
        %v855 = vld [vmem:[#allocation8 + $0xc0] sm:$0xff]
        %v856 = vld [vmem:[#allocation8 + $0xc8] sm:$0xff]
        %v857 = vld [vmem:[#allocation8 + $0xd0] sm:$0xff]
        %v858 = vld [vmem:[#allocation8 + $0xd8] sm:$0xff]
        %v859 = vld [vmem:[#allocation8 + $0xe0] sm:$0xff]
        %v860 = vld [vmem:[#allocation8 + $0xe8] sm:$0xff]
        %v861 = vld [vmem:[#allocation8 + $0xf0] sm:$0xff]
        %v862 = vld [vmem:[#allocation8 + $0xf8] sm:$0xff]
        %v863 = vld [vmem:[#allocation8 + $0x100] sm:$0xff]
        %v864 = vld [vmem:[#allocation8 + $0x108] sm:$0xff]
        %v865 = vld [vmem:[#allocation8 + $0x110] sm:$0xff]
        %v866 = vld [vmem:[#allocation8 + $0x118] sm:$0xff]
        %v867 = vld [vmem:[#allocation8 + $0x120] sm:$0xff]
        %v868 = vld [vmem:[#allocation8 + $0x128] sm:$0xff]
        %v869 = vld [vmem:[#allocation8 + $0x130] sm:$0xff]
        %v870 = vld [vmem:[#allocation8 + $0x138] sm:$0xff]
        %v871 = vld [vmem:[#allocation8 + $0x140] sm:$0xff]
        %v872 = vld [vmem:[#allocation8 + $0x148] sm:$0xff]
        %v873 = vld [vmem:[#allocation8 + $0x150] sm:$0xff]
        %v874 = vld [vmem:[#allocation8 + $0x158] sm:$0xff]
        %v875 = vld [vmem:[#allocation8 + $0x160] sm:$0xff]
        %v876 = vld [vmem:[#allocation8 + $0x168] sm:$0xff]
        %v877 = vld [vmem:[#allocation8 + $0x170] sm:$0xff]
        %v878 = vld [vmem:[#allocation8 + $0x178] sm:$0xff]
        %v879 = vld [vmem:[%s5] sm:$0x1]
        %v881 = vlaneseq
        %v882 = vshrl.u32 %v881, 7
        %v883 = vsub.s32 0, %v882
        %v884 = vrot.slane %v879, %v883
        %886 = vmatprep.subr.mxu0 0.0
        %887 = vmatpush1.msra.mxu0 %v846
        %888 = vmatprep.subr.mxu0 0.0
        %889 = vmatpush1.msra.mxu0 %v845
        %890 = vmatprep.subr.mxu0 0.0
        %891 = vmatpush1.msra.mxu0 %v844
        %892 = vmatprep.subr.mxu0 0.0
        %893 = vmatpush1.msra.mxu0 %v843
        %894 = vmatprep.subr.mxu0 0.0
        %895 = vmatpush1.msra.mxu0 %v842
        %896 = vmatprep.subr.mxu0 0.0
        %897 = vmatpush1.msra.mxu0 %v841
        %898 = vmatprep.subr.mxu0 0.0
        %899 = vmatpush1.msra.mxu0 %v840
        %900 = vmatprep.subr.mxu0 0.0
        %901 = vmatpush1.msra.mxu0 %v839
        %902 = vmatprep.subr.mxu0 0.0
        %903 = vmatpush1.msra.mxu0 %v838
        %904 = vmatprep.subr.mxu0 0.0
        %905 = vmatpush1.msra.mxu0 %v837
        %906 = vmatprep.subr.mxu0 0.0
        %907 = vmatpush1.msra.mxu0 %v836
        %908 = vmatprep.subr.mxu0 0.0
        %909 = vmatpush1.msra.mxu0 %v835
        %910 = vmatprep.subr.mxu0 0.0
        %911 = vmatpush1.msra.mxu0 %v834
        %912 = vmatprep.subr.mxu0 0.0
        %913 = vmatpush1.msra.mxu0 %v833
        %914 = vmatprep.subr.mxu0 0.0
        %915 = vmatpush1.msra.mxu0 %v832
        %916 = vmatprep.subr.mxu0 0.0
        %917 = vmatpush1.msra.mxu0 %v831
        %918 = vmatprep.subr.mxu0 0.0
        %919 = vmatpush2.msra.mxu0 %v862
        %920 = vmatprep.subr.mxu0 0.0
        %921 = vmatpush2.msra.mxu0 %v861
        %922 = vmatprep.subr.mxu0 0.0
        %923 = vmatpush2.msra.mxu0 %v860
        %924 = vmatprep.subr.mxu0 0.0
        %925 = vmatpush2.msra.mxu0 %v859
        %926 = vmatprep.subr.mxu0 0.0
        %927 = vmatpush2.msra.mxu0 %v858
        %928 = vmatprep.subr.mxu0 0.0
        %929 = vmatpush2.msra.mxu0 %v857
        %930 = vmatprep.subr.mxu0 0.0
        %931 = vmatpush2.msra.mxu0 %v856
        %932 = vmatprep.subr.mxu0 0.0
        %933 = vmatpush2.msra.mxu0 %v855
        %934 = vmatprep.subr.mxu0 0.0
        %935 = vmatpush2.msra.mxu0 %v854
        %936 = vmatprep.subr.mxu0 0.0
        %937 = vmatpush2.msra.mxu0 %v853
        %938 = vmatprep.subr.mxu0 0.0
        %939 = vmatpush2.msra.mxu0 %v852
        %940 = vmatprep.subr.mxu0 0.0
        %941 = vmatpush2.msra.mxu0 %v851
        %942 = vmatprep.subr.mxu0 0.0
        %943 = vmatpush2.msra.mxu0 %v850
        %944 = vmatprep.subr.mxu0 0.0
        %945 = vmatpush2.msra.mxu0 %v849
        %946 = vmatprep.subr.mxu0 0.0
        %947 = vmatpush2.msra.mxu0 %v848
        %948 = vmatprep.subr.mxu0 0.0
        %949 = vmatpush2.msra.mxu0 %v847
        %950 = vmatprep.mubr.f32.mxu0 %v784
        %951 = vmatmul.mubr.f32.gmra.mxu0 %v783
        %v952 = vpop.f32.mrf.mxu0
        %v953 = vadd.f32 %v884, %v952
        %v954 = vpop.f32.mrf.mxu0
        %955 = vmatprep.mubr.f32.mxu0 %v787
        %956 = vmatmul.mubr.f32.gmra.mxu0 %v786
        %v957 = vpop.f32.mrf.mxu0
        %v958 = vadd.f32 %v884, %v957
        %v959 = vpop.f32.mrf.mxu0
        %960 = vmatprep.mubr.f32.mxu0 %v790
        %961 = vmatmul.mubr.f32.gmra.mxu0 %v789
        %v962 = vpop.f32.mrf.mxu0
        %v963 = vadd.f32 %v884, %v962
        %v964 = vpop.f32.mrf.mxu0
        %965 = vmatprep.mubr.f32.mxu0 %v793
        %966 = vmatmul.mubr.f32.gmra.mxu0 %v792
        %v967 = vpop.f32.mrf.mxu0
        %v968 = vadd.f32 %v884, %v967
        %v969 = vpop.f32.mrf.mxu0
        %970 = vmatprep.mubr.f32.mxu0 %v796
        %971 = vmatmul.mubr.f32.gmra.mxu0 %v795
        %v972 = vpop.f32.mrf.mxu0
        %v973 = vadd.f32 %v884, %v972
        %v974 = vpop.f32.mrf.mxu0
        %975 = vmatprep.mubr.f32.mxu0 %v799
        %976 = vmatmul.mubr.f32.gmra.mxu0 %v798
        %v977 = vpop.f32.mrf.mxu0
        %v978 = vadd.f32 %v884, %v977
        %v979 = vpop.f32.mrf.mxu0
        %980 = vmatprep.mubr.f32.mxu0 %v802
        %981 = vmatmul.mubr.f32.gmra.mxu0 %v801
        %v982 = vpop.f32.mrf.mxu0
        %v983 = vadd.f32 %v884, %v982
        %v984 = vpop.f32.mrf.mxu0
        %985 = vmatprep.mubr.f32.mxu0 %v805
        %986 = vmatmul.mubr.f32.gmra.mxu0 %v804
        %v987 = vpop.f32.mrf.mxu0
        %v988 = vadd.f32 %v884, %v987
        %v989 = vpop.f32.mrf.mxu0
        %990 = vmatprep.mubr.f32.mxu0 %v808
        %991 = vmatmul.mubr.f32.gmra.mxu0 %v807
        %v992 = vpop.f32.mrf.mxu0
        %v993 = vadd.f32 %v884, %v992
        %v994 = vpop.f32.mrf.mxu0
        %995 = vmatprep.mubr.f32.mxu0 %v811
        %996 = vmatmul.mubr.f32.gmra.mxu0 %v810
        %v997 = vpop.f32.mrf.mxu0
        %v998 = vadd.f32 %v884, %v997
        %v999 = vpop.f32.mrf.mxu0
        %1000 = vmatprep.mubr.f32.mxu0 %v814
        %1001 = vmatmul.mubr.f32.gmra.mxu0 %v813
        %v1002 = vpop.f32.mrf.mxu0
        %v1003 = vadd.f32 %v884, %v1002
        %v1004 = vpop.f32.mrf.mxu0
        %1005 = vmatprep.mubr.f32.mxu0 %v817
        %1006 = vmatmul.mubr.f32.gmra.mxu0 %v816
        %v1007 = vpop.f32.mrf.mxu0
        %v1008 = vadd.f32 %v884, %v1007
        %v1009 = vpop.f32.mrf.mxu0
        %1010 = vmatprep.mubr.f32.mxu0 %v820
        %1011 = vmatmul.mubr.f32.gmra.mxu0 %v819
        %v1012 = vpop.f32.mrf.mxu0
        %v1013 = vadd.f32 %v884, %v1012
        %v1014 = vpop.f32.mrf.mxu0
        %1015 = vmatprep.mubr.f32.mxu0 %v823
        %1016 = vmatmul.mubr.f32.gmra.mxu0 %v822
        %v1017 = vpop.f32.mrf.mxu0
        %v1018 = vadd.f32 %v884, %v1017
        %v1019 = vpop.f32.mrf.mxu0
        %1020 = vmatprep.mubr.f32.mxu0 %v826
        %1021 = vmatmul.mubr.f32.gmra.mxu0 %v825
        %v1022 = vpop.f32.mrf.mxu0
        %v1023 = vadd.f32 %v884, %v1022
        %v1024 = vpop.f32.mrf.mxu0
        %1025 = vmatprep.mubr.f32.mxu0 %v829
        %1026 = vmatmul.mubr.f32.gmra.mxu0 %v828
        %v1027 = vpop.f32.mrf.mxu0
        %v1028 = vadd.f32 %v884, %v1027
        %v1029 = vpop.f32.mrf.mxu0
        %1030 = vdwg.mxu0
        %1031 = vmatprep.subr.mxu0 0.0
        %1032 = vmatpush1.msra.mxu0 %v878
        %1033 = vmatprep.subr.mxu0 0.0
        %1034 = vmatpush1.msra.mxu0 %v877
        %1035 = vmatprep.subr.mxu0 0.0
        %1036 = vmatpush1.msra.mxu0 %v876
        %1037 = vmatprep.subr.mxu0 0.0
        %1038 = vmatpush1.msra.mxu0 %v875
        %1039 = vmatprep.subr.mxu0 0.0
        %1040 = vmatpush1.msra.mxu0 %v874
        %1041 = vmatprep.subr.mxu0 0.0
        %1042 = vmatpush1.msra.mxu0 %v873
        %1043 = vmatprep.subr.mxu0 0.0
        %1044 = vmatpush1.msra.mxu0 %v872
        %1045 = vmatprep.subr.mxu0 0.0
        %1046 = vmatpush1.msra.mxu0 %v871
        %1047 = vmatprep.subr.mxu0 0.0
        %1048 = vmatpush1.msra.mxu0 %v870
        %1049 = vmatprep.subr.mxu0 0.0
        %1050 = vmatpush1.msra.mxu0 %v869
        %1051 = vmatprep.subr.mxu0 0.0
        %1052 = vmatpush1.msra.mxu0 %v868
        %1053 = vmatprep.subr.mxu0 0.0
        %1054 = vmatpush1.msra.mxu0 %v867
        %1055 = vmatprep.subr.mxu0 0.0
        %1056 = vmatpush1.msra.mxu0 %v866
        %1057 = vmatprep.subr.mxu0 0.0
        %1058 = vmatpush1.msra.mxu0 %v865
        %1059 = vmatprep.subr.mxu0 0.0
        %1060 = vmatpush1.msra.mxu0 %v864
        %1061 = vmatprep.subr.mxu0 0.0
        %1062 = vmatpush1.msra.mxu0 %v863
        %1063 = vmatprep.subr.mxu0 0.0
        %1064 = vmatpush2.msra.mxu0 0.0
        %1065 = vmatprep.subr.mxu0 0.0
        %1066 = vmatpush2.msra.mxu0 0.0
        %1067 = vmatprep.subr.mxu0 0.0
        %1068 = vmatpush2.msra.mxu0 0.0
        %1069 = vmatprep.subr.mxu0 0.0
        %1070 = vmatpush2.msra.mxu0 0.0
        %1071 = vmatprep.subr.mxu0 0.0
        %1072 = vmatpush2.msra.mxu0 0.0
        %1073 = vmatprep.subr.mxu0 0.0
        %1074 = vmatpush2.msra.mxu0 0.0
        %1075 = vmatprep.subr.mxu0 0.0
        %1076 = vmatpush2.msra.mxu0 0.0
        %1077 = vmatprep.subr.mxu0 0.0
        %1078 = vmatpush2.msra.mxu0 0.0
        %1079 = vmatprep.subr.mxu0 0.0
        %1080 = vmatpush2.msra.mxu0 0.0
        %1081 = vmatprep.subr.mxu0 0.0
        %1082 = vmatpush2.msra.mxu0 0.0
        %1083 = vmatprep.subr.mxu0 0.0
        %1084 = vmatpush2.msra.mxu0 0.0
        %1085 = vmatprep.subr.mxu0 0.0
        %1086 = vmatpush2.msra.mxu0 0.0
        %1087 = vmatprep.subr.mxu0 0.0
        %1088 = vmatpush2.msra.mxu0 0.0
        %1089 = vmatprep.subr.mxu0 0.0
        %1090 = vmatpush2.msra.mxu0 0.0
        %1091 = vmatprep.subr.mxu0 0.0
        %1092 = vmatpush2.msra.mxu0 0.0
        %1093 = vmatprep.subr.mxu0 0.0
        %1094 = vmatpush2.msra.mxu0 0.0
        %1095 = vmatprep.mubr.f32.mxu0 0.0
        %1096 = vmatmul.mubr.f32.gmra.mxu0 %v785
        %v1097 = vpop.f32.mrf.mxu0
        %v1098 = vadd.f32 %v953, %v1097
        %v1099 = vpop.f32.mrf.mxu0
        %1100 = vmatprep.mubr.f32.mxu0 0.0
        %1101 = vmatmul.mubr.f32.gmra.mxu0 %v788
        %v1102 = vpop.f32.mrf.mxu0
        %v1103 = vadd.f32 %v958, %v1102
        %v1104 = vpop.f32.mrf.mxu0
        %1105 = vmatprep.mubr.f32.mxu0 0.0
        %1106 = vmatmul.mubr.f32.gmra.mxu0 %v791
        %v1107 = vpop.f32.mrf.mxu0
        %v1108 = vadd.f32 %v963, %v1107
        %v1109 = vpop.f32.mrf.mxu0
        %1110 = vmatprep.mubr.f32.mxu0 0.0
        %1111 = vmatmul.mubr.f32.gmra.mxu0 %v794
        %v1112 = vpop.f32.mrf.mxu0
        %v1113 = vadd.f32 %v968, %v1112
        %v1114 = vpop.f32.mrf.mxu0
        %1115 = vmatprep.mubr.f32.mxu0 0.0
        %1116 = vmatmul.mubr.f32.gmra.mxu0 %v797
        %v1117 = vpop.f32.mrf.mxu0
        %v1118 = vadd.f32 %v973, %v1117
        %v1119 = vpop.f32.mrf.mxu0
        %1120 = vmatprep.mubr.f32.mxu0 0.0
        %1121 = vmatmul.mubr.f32.gmra.mxu0 %v800
        %v1122 = vpop.f32.mrf.mxu0
        %v1123 = vadd.f32 %v978, %v1122
        %v1124 = vpop.f32.mrf.mxu0
        %1125 = vmatprep.mubr.f32.mxu0 0.0
        %1126 = vmatmul.mubr.f32.gmra.mxu0 %v803
        %v1127 = vpop.f32.mrf.mxu0
        %v1128 = vadd.f32 %v983, %v1127
        %v1129 = vpop.f32.mrf.mxu0
        %1130 = vmatprep.mubr.f32.mxu0 0.0
        %1131 = vmatmul.mubr.f32.gmra.mxu0 %v806
        %v1132 = vpop.f32.mrf.mxu0
        %v1133 = vadd.f32 %v988, %v1132
        %v1134 = vpop.f32.mrf.mxu0
        %1135 = vmatprep.mubr.f32.mxu0 0.0
        %1136 = vmatmul.mubr.f32.gmra.mxu0 %v809
        %v1137 = vpop.f32.mrf.mxu0
        %v1138 = vadd.f32 %v993, %v1137
        %v1139 = vpop.f32.mrf.mxu0
        %1140 = vmatprep.mubr.f32.mxu0 0.0
        %1141 = vmatmul.mubr.f32.gmra.mxu0 %v812
        %v1142 = vpop.f32.mrf.mxu0
        %v1143 = vadd.f32 %v998, %v1142
        %v1144 = vpop.f32.mrf.mxu0
        %1145 = vmatprep.mubr.f32.mxu0 0.0
        %1146 = vmatmul.mubr.f32.gmra.mxu0 %v815
        %v1147 = vpop.f32.mrf.mxu0
        %v1148 = vadd.f32 %v1003, %v1147
        %v1149 = vpop.f32.mrf.mxu0
        %1150 = vmatprep.mubr.f32.mxu0 0.0
        %1151 = vmatmul.mubr.f32.gmra.mxu0 %v818
        %v1152 = vpop.f32.mrf.mxu0
        %v1153 = vadd.f32 %v1008, %v1152
        %v1154 = vpop.f32.mrf.mxu0
        %1155 = vmatprep.mubr.f32.mxu0 0.0
        %1156 = vmatmul.mubr.f32.gmra.mxu0 %v821
        %v1157 = vpop.f32.mrf.mxu0
        %v1158 = vadd.f32 %v1013, %v1157
        %v1159 = vpop.f32.mrf.mxu0
        %1160 = vmatprep.mubr.f32.mxu0 0.0
        %1161 = vmatmul.mubr.f32.gmra.mxu0 %v824
        %v1162 = vpop.f32.mrf.mxu0
        %v1163 = vadd.f32 %v1018, %v1162
        %v1164 = vpop.f32.mrf.mxu0
        %1165 = vmatprep.mubr.f32.mxu0 0.0
        %1166 = vmatmul.mubr.f32.gmra.mxu0 %v827
        %v1167 = vpop.f32.mrf.mxu0
        %v1168 = vadd.f32 %v1023, %v1167
        %v1169 = vpop.f32.mrf.mxu0
        %1170 = vmatprep.mubr.f32.mxu0 0.0
        %1171 = vmatmul.mubr.f32.gmra.mxu0 %v830
        %v1172 = vpop.f32.mrf.mxu0
        %v1173 = vadd.f32 %v1028, %v1172
        %v1174 = vpop.f32.mrf.mxu0
        %1175 = vdwg.mxu0
        %v1176 = vmax.f32 %v1098, 0.0
        %v1177 = vmax.f32 %v1103, 0.0
        %v1178 = vmax.f32 %v1108, 0.0
        %v1179 = vmax.f32 %v1113, 0.0
        %v1180 = vmax.f32 %v1118, 0.0
        %v1181 = vmax.f32 %v1123, 0.0
        %v1182 = vmax.f32 %v1128, 0.0
        %v1183 = vmax.f32 %v1133, 0.0
        %v1184 = vmax.f32 %v1138, 0.0
        %v1185 = vmax.f32 %v1143, 0.0
        %v1186 = vmax.f32 %v1148, 0.0
        %v1187 = vmax.f32 %v1153, 0.0
        %v1188 = vmax.f32 %v1158, 0.0
        %v1189 = vmax.f32 %v1163, 0.0
        %v1190 = vmax.f32 %v1168, 0.0
        %v1191 = vmax.f32 %v1173, 0.0
        %v1192 = vld [vmem:[%s6] sm:$0x1]
        %v1194 = vlaneseq
        %v1195 = vshrl.u32 %v1194, 7
        %v1196 = vsub.s32 0, %v1195
        %v1197 = vrot.slane %v1192, %v1196
        %v1199 = vmul.f32 %v1176, %v1197
        %v1200 = vmul.f32 %v1177, %v1197
        %v1201 = vmul.f32 %v1178, %v1197
        %v1202 = vmul.f32 %v1179, %v1197
        %v1203 = vmul.f32 %v1180, %v1197
        %v1204 = vmul.f32 %v1181, %v1197
        %v1205 = vmul.f32 %v1182, %v1197
        %v1206 = vmul.f32 %v1183, %v1197
        %v1207 = vmul.f32 %v1184, %v1197
        %v1208 = vmul.f32 %v1185, %v1197
        %v1209 = vmul.f32 %v1186, %v1197
        %v1210 = vmul.f32 %v1187, %v1197
        %v1211 = vmul.f32 %v1188, %v1197
        %v1212 = vmul.f32 %v1189, %v1197
        %v1213 = vmul.f32 %v1190, %v1197
        %v1214 = vmul.f32 %v1191, %v1197
        %v1215 = vld [vmem:[%s7] sm:$0x1]
        %v1217 = vlaneseq
        %v1218 = vshrl.u32 %v1217, 7
        %v1219 = vsub.s32 0, %v1218
        %v1220 = vrot.slane %v1215, %v1219
        %v1222 = vadd.f32 %v1199, %v1220
        %v1223 = vadd.f32 %v1200, %v1220
        %v1224 = vadd.f32 %v1201, %v1220
        %v1225 = vadd.f32 %v1202, %v1220
        %v1226 = vadd.f32 %v1203, %v1220
        %v1227 = vadd.f32 %v1204, %v1220
        %v1228 = vadd.f32 %v1205, %v1220
        %v1229 = vadd.f32 %v1206, %v1220
        %v1230 = vadd.f32 %v1207, %v1220
        %v1231 = vadd.f32 %v1208, %v1220
        %v1232 = vadd.f32 %v1209, %v1220
        %v1233 = vadd.f32 %v1210, %v1220
        %v1234 = vadd.f32 %v1211, %v1220
        %v1235 = vadd.f32 %v1212, %v1220
        %v1236 = vadd.f32 %v1213, %v1220
        %v1237 = vadd.f32 %v1214, %v1220
        %v1238 = vld [vmem:[%s347] sm:$0xff]
        %v1239 = vld [vmem:[%s347 + $0x8] sm:$0xff]
        %v1240 = vld [vmem:[%s347 + $0x10] sm:$0xff]
        %v1241 = vld [vmem:[%s347 + $0x18] sm:$0xff]
        %v1242 = vld [vmem:[%s347 + $0x20] sm:$0xff]
        %v1243 = vld [vmem:[%s347 + $0x28] sm:$0xff]
        %v1244 = vld [vmem:[%s347 + $0x30] sm:$0xff]
        %v1245 = vld [vmem:[%s347 + $0x38] sm:$0xff]
        %v1246 = vld [vmem:[%s347 + $0x40] sm:$0xff]
        %v1247 = vld [vmem:[%s347 + $0x48] sm:$0xff]
        %v1248 = vld [vmem:[%s347 + $0x50] sm:$0xff]
        %v1249 = vld [vmem:[%s347 + $0x58] sm:$0xff]
        %v1250 = vld [vmem:[%s347 + $0x60] sm:$0xff]
        %v1251 = vld [vmem:[%s347 + $0x68] sm:$0xff]
        %v1252 = vld [vmem:[%s347 + $0x70] sm:$0xff]
        %v1253 = vld [vmem:[%s347 + $0x78] sm:$0xff]
        %v1254 = vmul.f32 %v1222, %v1238
        %v1255 = vmul.f32 %v1223, %v1239
        %v1256 = vmul.f32 %v1224, %v1240
        %v1257 = vmul.f32 %v1225, %v1241
        %v1258 = vmul.f32 %v1226, %v1242
        %v1259 = vmul.f32 %v1227, %v1243
        %v1260 = vmul.f32 %v1228, %v1244
        %v1261 = vmul.f32 %v1229, %v1245
        %v1262 = vmul.f32 %v1230, %v1246
        %v1263 = vmul.f32 %v1231, %v1247
        %v1264 = vmul.f32 %v1232, %v1248
        %v1265 = vmul.f32 %v1233, %v1249
        %v1266 = vmul.f32 %v1234, %v1250
        %v1267 = vmul.f32 %v1235, %v1251
        %v1268 = vmul.f32 %v1236, %v1252
        %v1269 = vmul.f32 %v1237, %v1253
        %1270 = vadd.xlane.f32.xlu0 %v1254
        %v1271 = vpop.xlane.xlu0 %1270
        %1272 = vadd.xlane.f32.xlu0 %v1255
        %v1273 = vpop.xlane.xlu0 %1272
        %1274 = vadd.xlane.f32.xlu0 %v1256
        %v1275 = vpop.xlane.xlu0 %1274
        %1276 = vadd.xlane.f32.xlu0 %v1257
        %v1277 = vpop.xlane.xlu0 %1276
        %1278 = vadd.xlane.f32.xlu0 %v1258
        %v1279 = vpop.xlane.xlu0 %1278
        %1280 = vadd.xlane.f32.xlu0 %v1259
        %v1281 = vpop.xlane.xlu0 %1280
        %1282 = vadd.xlane.f32.xlu0 %v1260
        %v1283 = vpop.xlane.xlu0 %1282
        %1284 = vadd.xlane.f32.xlu0 %v1261
        %v1285 = vpop.xlane.xlu0 %1284
        %1286 = vadd.xlane.f32.xlu0 %v1262
        %v1287 = vpop.xlane.xlu0 %1286
        %1288 = vadd.xlane.f32.xlu0 %v1263
        %v1289 = vpop.xlane.xlu0 %1288
        %1290 = vadd.xlane.f32.xlu0 %v1264
        %v1291 = vpop.xlane.xlu0 %1290
        %1292 = vadd.xlane.f32.xlu0 %v1265
        %v1293 = vpop.xlane.xlu0 %1292
        %1294 = vadd.xlane.f32.xlu0 %v1266
        %v1295 = vpop.xlane.xlu0 %1294
        %1296 = vadd.xlane.f32.xlu0 %v1267
        %v1297 = vpop.xlane.xlu0 %1296
        %1298 = vadd.xlane.f32.xlu0 %v1268
        %v1299 = vpop.xlane.xlu0 %1298
        %1300 = vadd.xlane.f32.xlu0 %v1269
        %v1301 = vpop.xlane.xlu0 %1300
        %1302 = vst [vmem:[%s392] sm:$0xff] %v1271
        %1303 = vst [vmem:[%s392 + $0x8] sm:$0xff] %v1273
        %1304 = vst [vmem:[%s392 + $0x10] sm:$0xff] %v1275
        %1305 = vst [vmem:[%s392 + $0x18] sm:$0xff] %v1277
        %1306 = vst [vmem:[%s392 + $0x20] sm:$0xff] %v1279
        %1307 = vst [vmem:[%s392 + $0x28] sm:$0xff] %v1281
        %1308 = vst [vmem:[%s392 + $0x30] sm:$0xff] %v1283
        %1309 = vst [vmem:[%s392 + $0x38] sm:$0xff] %v1285
        %1310 = vst [vmem:[%s392 + $0x40] sm:$0xff] %v1287
        %1311 = vst [vmem:[%s392 + $0x48] sm:$0xff] %v1289
        %1312 = vst [vmem:[%s392 + $0x50] sm:$0xff] %v1291
        %1313 = vst [vmem:[%s392 + $0x58] sm:$0xff] %v1293
        %1314 = vst [vmem:[%s392 + $0x60] sm:$0xff] %v1295
        %1315 = vst [vmem:[%s392 + $0x68] sm:$0xff] %v1297
        %1316 = vst [vmem:[%s392 + $0x70] sm:$0xff] %v1299
        %1317 = vst [vmem:[%s392 + $0x78] sm:$0xff] %v1301
        %s1318 = sand.u32 %s215, 1
        %s1319 = scalar_lea.sflag [#allocation4], %s1318
        %s1320 = sand.u32 %s215, 1
        %s1321 = smul.addr %s1320, 128
        %s1322 = scalar_lea.vmem [#allocation10], %s1321
        // Predicated region
        $region69: #{tpu_custom_call.1} parent=51 // pred_check
          %p1323 = pneg %p225
        $region70: #{tpu_custom_call.1} parent=51 // pred_check_branch
          %1325 = sbr.rel (%p1323) target = $region72
        $region71: #{tpu_custom_call.1} parent=51 // pred_region
          %s1326 = smul.u32 16, %s29
          %s1328 = ssub.s32 2048, 2048
          %1329 = vsyncadd %s1319, %s1328
          %s1330 = smul.addr %s1326, 128
          %s1331 = scalar_lea.hbm %s8, %s1330
          %s1332 = sshll.u32 %s1322, 4
          %s1333 = int_to_ptr.vmem [resolvable:$true] %s1332
          %1338 = dma.vmem_to_hbm [thread:$0]  %s1333, 2048, %s1331, %s1319, 128, 128, 8
        $region72: #{tpu_custom_call.1} parent=51 // pred_fallthru
          _
      $region52: #{tpu_custom_call.1} parent=5 // pred_fallthru
        _
      %p1339 = scmp.le.s32.totalorder 2, %s24
      // Predicated region
      $region73: #{tpu_custom_call.1} parent=5 // pred_check
        %p1340 = pneg %p1339
      $region74: #{tpu_custom_call.1} parent=5 // pred_check_branch
        %1342 = sbr.rel (%p1340) target = $region76
      $region75: #{tpu_custom_call.1} parent=5 // pred_region
        %s1343 = ssub.s32 %s24, 2
        // Predicated region
        $region77: #{tpu_custom_call.1} parent=75 // pred_check
          %p1344 = pneg %p231
        $region78: #{tpu_custom_call.1} parent=75 // pred_check_branch
          %1346 = sbr.rel (%p1344) target = $region80
        $region79: #{tpu_custom_call.1} parent=75 // pred_region
          %s1347 = sand.u32 %s216, 1
          %s1348 = scalar_lea.sflag [#allocation4], %s1347
          %s1349 = sand.u32 %s216, 1
          %s1350 = smul.addr %s1349, 128
          %s1351 = scalar_lea.vmem [#allocation10], %s1350
          %1352 = dma.done %s1348, 2048
        $region80: #{tpu_custom_call.1} parent=75 // pred_fallthru
          _
      $region76: #{tpu_custom_call.1} parent=5 // pred_fallthru
        _
    $region6: #{tpu_custom_call.1} parent=1 // loop_footer
      %s28 = sadd.s32 1, %s24
    $region7: #{tpu_custom_call.1} parent=1 // loop_footer_branch
      %23 = sbr.rel target = $region3
    $region8: #{tpu_custom_call.1} parent=1 // loop_exit
      _
    %1353 = vsyncpa [#allocation3], 1
    %s1354 = scalar_lea.sflag [#allocation3], 1
    %1355 = vsyncpa %s1354, 1
    %1356 = vsyncpa [#allocation6], 1
    %s1357 = scalar_lea.sflag [#allocation6], 1
    %1358 = vsyncpa %s1357, 1
    %1359 = vsyncpa [#allocation9], 1
    %1360 = vsyncpa [#allocation4], 1
    %s1361 = scalar_lea.sflag [#allocation4], 1
    %1362 = vsyncpa %s1361, 1

</llo_original>
